<compile_context>
chip_gen: v7x
topology: tpu7x:2x2x1
jax: 0.10.0
libtpu: 0.0.40
codegen_flags: <defaults>
</compile_context>

<pallas_src>
import functools

import jax
import jax.numpy as jnp
import numpy as np
from jax import lax
from jax.experimental import pallas as pl
from jax.experimental.pallas import tpu as pltpu


def _round_up(x, m):
    return ((x + m - 1) // m) * m


def _vmem_limit_bytes():
    """Generation-aware scoped-VMEM limit (leave headroom for double buffers)."""
    try:
        phys = pltpu.get_tpu_info().vmem_capacity_bytes
    except Exception:  # emulator / older jax: fall back to a conservative value
        phys = 64 * 1024 * 1024
    return int(min(phys - 16 * 1024 * 1024, 100 * 1024 * 1024))


# ----------------------------- Pallas kernels ------------------------------


def _make_conv_stats_kernel(KH, KW, OH, OW, OHW_pad, stride, dilation, c_out):
    """Kernel 1: per-image direct convolution as a single fused MXU matmul
    (patch matrix x patch-layout weights) plus per-image BatchNorm partial
    statistics.  Output is channel-major so the final NCHW result is a reshape."""
    OHW = OH * OW

    def kernel(x_ref, w_ref, y_ref, sum_ref, sumsq_ref):
        # x_ref    : (1, Hp, Wp, Cin)      padded NHWC image, bf16
        # w_ref    : (KH*KW*Cin, Cpad)     patch-layout weights, bf16 (Cout zero-padded)
        # y_ref    : (1, Cout, OHW_pad)    conv output, channel-major, lane-dense
        # sum_ref  : (1, 1, Cpad)          per-image sum over spatial positions (f32)
        # sumsq_ref: (1, 1, Cpad)          per-image sum of squares (f32)
        taps = []
        for kh in range(KH):
            h0 = kh * dilation
            for kw in range(KW):
                w0 = kw * dilation
                if stride == 1:
                    xs = x_ref[0, h0:h0 + OH, w0:w0 + OW, :]          # (OH, OW, Cin)
                else:
                    xs = x_ref[0,
                               pl.ds(h0, OH, stride=stride),
                               pl.ds(w0, OW, stride=stride), :]
                taps.append(xs.reshape(OHW, xs.shape[-1]))            # (OHW, Cin)
        patch = jnp.concatenate(taps, axis=-1)                        # (OHW, KH*KW*Cin)
        if OHW_pad > OHW:
            patch = jnp.pad(patch, ((0, OHW_pad - OHW), (0, 0)))      # zero rows

        # Single MXU matmul: bf16 operands, f32 accumulation inside the MXU.
        a = jnp.dot(patch, w_ref[...],
                    preferred_element_type=jnp.float32)               # (OHW_pad, Cpad)

        # Per-image partial BN stats (padded rows/columns contribute exact zeros;
        # reduced across images in the wrapper so the grid axis stays 'parallel').
        sum_ref[0] = jnp.sum(a, axis=0, keepdims=True)                # (1, Cpad)
        sumsq_ref[0] = jnp.sum(a * a, axis=0, keepdims=True)          # (1, Cpad)

        # Channel-major, lane-dense store (one XLU transpose per image, off the
        # matmul critical path).
        y_ref[0] = a.T[:c_out, :]                                     # (Cout, OHW_pad)

    return kernel


def _bn_relu_kernel(y_ref, scale_ref, shift_ref, o_ref):
    """Kernel 2: fused affine BatchNorm (precomputed per-row scale/shift) + ReLU
    on (rows, cols) f32 tiles — pure VPU, lane-dense loads and stores."""
    o_ref[...] = jnp.maximum(y_ref[...] * scale_ref[...] + shift_ref[...], 0.0)


# ------------------------------- wrapper -----------------------------------


def conv_bn_relu_forward(x, weight, gamma, beta, *, stride=1, padding=0,
                         dilation=1, eps=1e-5):
    """Forward pass of conv_bn_relu. x: [N, Cin, H, W] (NCHW), float32."""
    N, Cin, H, W = x.shape
    Cout, _, KH, KW = weight.shape
    OH = (H + 2 * padding - dilation * (KH - 1) - 1) // stride + 1
    OW = (W + 2 * padding - dilation * (KW - 1) - 1) // stride + 1
    OHW = OH * OW
    OHW_pad = _round_up(OHW, 128)              # lane-dense spatial axis
    Cpad = _round_up(max(Cout, 128), 128)      # lane-dense MXU N dimension
    Hp, Wp = H + 2 * padding, W + 2 * padding

    # ---- layout glue: NCHW -> NHWC + spatial zero pad, bf16 operands (no im2col) ----
    x_nhwc = jnp.transpose(x, (0, 2, 3, 1))
    x_pad = jnp.pad(x_nhwc, ((0, 0), (padding, padding), (padding, padding), (0, 0)))
    x_pad = x_pad.astype(jnp.bfloat16)

    # weight (Cout, Cin, KH, KW) -> patch layout (KH*KW*Cin, Cpad), bf16,
    # output channels zero-padded.  Column ordering matches the in-kernel tap concat.
    w_patch = jnp.transpose(weight, (2, 3, 1, 0)).reshape(KH * KW * Cin, Cout)
    w_patch = jnp.pad(w_patch, ((0, 0), (0, Cpad - Cout))).astype(jnp.bfloat16)

    vmem_limit = _vmem_limit_bytes()
    cparams1 = pltpu.CompilerParams(
        dimension_semantics=("parallel",),     # per-image, no shared accumulator
        vmem_limit_bytes=vmem_limit)

    # ---- Pallas kernel 1: fused-patch conv + per-image BN stat partials ----
    kernel1 = _make_conv_stats_kernel(KH, KW, OH, OW, OHW_pad, stride, dilation, Cout)
    y, sums, sumsq = pl.pallas_call(
        kernel1,
        out_shape=(jax.ShapeDtypeStruct((N, Cout, OHW_pad), jnp.float32),
                   jax.ShapeDtypeStruct((N, 1, Cpad), jnp.float32),
                   jax.ShapeDtypeStruct((N, 1, Cpad), jnp.float32)),
        grid_spec=pltpu.PrefetchScalarGridSpec(
            num_scalar_prefetch=0,
            grid=(N,),
            in_specs=[pl.BlockSpec((1, Hp, Wp, Cin), lambda n: (n, 0, 0, 0)),
                      pl.BlockSpec((KH * KW * Cin, Cpad), lambda n: (0, 0))],
            out_specs=[pl.BlockSpec((1, Cout, OHW_pad), lambda n: (n, 0, 0)),
                       pl.BlockSpec((1, 1, Cpad), lambda n: (n, 0, 0)),
                       pl.BlockSpec((1, 1, Cpad), lambda n: (n, 0, 0))]),
        compiler_params=cparams1,
    )(x_pad, w_patch)

    # ---- tiny scalar glue: training-mode BN batch stats -> per-channel affine ----
    cnt = float(N * OHW)                       # real spatial count (padding rows are 0)
    sums_t = jnp.sum(sums, axis=(0, 1))[:Cout]
    sumsq_t = jnp.sum(sumsq, axis=(0, 1))[:Cout]
    mean = sums_t / cnt
    # single-pass E[y^2]-E[y]^2 clamped >= 0 (guards rsqrt against cancellation)
    var = jnp.maximum(sumsq_t / cnt - mean * mean, 0.0)
    inv_std = lax.rsqrt(var + eps)
    scale_vec = gamma.astype(jnp.float32) * inv_std
    shift_vec = beta.astype(jnp.float32) - mean * scale_vec

    # ---- Pallas kernel 2: fused BN affine + ReLU (re-tiled, in-place over y) ----
    rows = N * Cout
    y2 = y.reshape(rows, OHW_pad)                              # metadata-only
    scale_rows = jnp.tile(scale_vec.reshape(Cout, 1), (N, 1))  # (rows, 1)
    shift_rows = jnp.tile(shift_vec.reshape(Cout, 1), (N, 1))

    # block sizing: lane-dense columns, ~<=4 MiB per block (merges images when the
    # problem is tiny, bounds VMEM when it is large)
    TC = OHW_pad if OHW_pad <= 2048 else 2048
    max_rows = max(8, ((4 * 1024 * 1024) // (TC * 4)) // 8 * 8)
    TR = rows if rows <= max_rows else max_rows
    grid2 = (pl.cdiv(rows, TR), pl.cdiv(OHW_pad, TC))
    cparams2 = pltpu.CompilerParams(
        dimension_semantics=("parallel", "parallel"),
        vmem_limit_bytes=vmem_limit)

    out2 = pl.pallas_call(
        _bn_relu_kernel,
        out_shape=jax.ShapeDtypeStruct((rows, OHW_pad), jnp.float32),
        grid_spec=pltpu.PrefetchScalarGridSpec(
            num_scalar_prefetch=0,
            grid=grid2,
            in_specs=[pl.BlockSpec((TR, TC), lambda i, j: (i, j)),
                      pl.BlockSpec((TR, 1), lambda i, j: (i, 0)),
                      pl.BlockSpec((TR, 1), lambda i, j: (i, 0))],
            out_specs=pl.BlockSpec((TR, TC), lambda i, j: (i, j))),
        input_output_aliases={0: 0},           # write BN+ReLU in place over y
        compiler_params=cparams2,
    )(y2, scale_rows, shift_rows)

    # channel-major already: metadata reshape (+ lane slice only if OHW was padded)
    out = out2.reshape(N, Cout, OHW_pad)[:, :, :OHW].reshape(N, Cout, OH, OW)
    return out


# ------------------------------ reference ----------------------------------


def _reference(x, weight, gamma, beta, *, stride, padding, dilation, eps=1e-5):
    y = lax.conv_general_dilated(
        x, weight,
        window_strides=(stride, stride),
        padding=((padding, padding), (padding, padding)),
        rhs_dilation=(dilation, dilation),
        dimension_numbers=("NCHW", "OIHW", "NCHW"))
    mean = jnp.mean(y, axis=(0, 2, 3), keepdims=True)
    var = jnp.mean((y - mean) ** 2, axis=(0, 2, 3), keepdims=True)
    yn = (y - mean) * lax.rsqrt(var + eps)
    yn = yn * gamma.reshape(1, -1, 1, 1) + beta.reshape(1, -1, 1, 1)
    return jnp.maximum(yn, 0.0)


# --------------------------------- main -------------------------------------


if __name__ == "__main__":
    # conv_bn_relu(in_channels=4, out_channels=8, kernel_size=3, padding=1, bias=False)
    N, Cin, H, W = 2, 4, 16, 16
    Cout, KH, KW = 8, 3, 3
    stride, padding, dilation = 1, 1, 1

    key = jax.random.PRNGKey(0)
    kx, kw = jax.random.split(key)
    x = jax.random.normal(kx, (N, Cin, H, W), dtype=jnp.float32)
    weight = 0.1 * jax.random.normal(kw, (Cout, Cin, KH, KW), dtype=jnp.float32)
    gamma = jnp.ones((Cout,), jnp.float32)   # nn.BatchNorm2d default init
    beta = jnp.zeros((Cout,), jnp.float32)   # nn.BatchNorm2d default init

    fwd = jax.jit(functools.partial(conv_bn_relu_forward,
                                    stride=stride, padding=padding, dilation=dilation))
    out = fwd(x, weight, gamma, beta)
    out = jax.block_until_ready(out)

    ref = _reference(x, weight, gamma, beta,
                     stride=stride, padding=padding, dilation=dilation)
    assert out.shape == (N, Cout, H, W), out.shape
    # bf16 matmul operands with f32 accumulation vs. f32 reference
    np.testing.assert_allclose(np.asarray(out), np.asarray(ref), rtol=1e-2, atol=1e-2)

    print("KERNEL_OK")
</pallas_src>

<mosaic_0001>
module attributes {stable_mosaic.version = 11 : i64} {
  func.func @kernel(%arg0: i32, %arg1: memref<1x18x18x4xbf16, #tpu.memory_space<vmem>>, %arg2: memref<36x128xbf16, #tpu.memory_space<vmem>>, %arg3: memref<1x8x256xf32, #tpu.memory_space<vmem>>, %arg4: memref<1x1x128xf32, #tpu.memory_space<vmem>>, %arg5: memref<1x1x128xf32, #tpu.memory_space<vmem>>) attributes {dimension_semantics = [#tpu.dimension_semantics<parallel>], iteration_bounds = array<i64: 2>, scalar_prefetch = 0 : i64, scratch_operands = 0 : i64, tpu.core_type = #tpu.core_type<tc>, window_params = [{transform_indices = @transform_0, window_bounds = array<i64: 1, 18, 18, 4>}, {pipeline_mode = #tpu.pipeline_mode<synchronous>, transform_indices = @transform_1, window_bounds = array<i64: 36, 128>}, {transform_indices = @transform_2, window_bounds = array<i64: 1, 8, 256>}, {transform_indices = @transform_3, window_bounds = array<i64: 1, 1, 128>}, {transform_indices = @transform_4, window_bounds = array<i64: 1, 1, 128>}]} {
    %c0 = arith.constant 0 : index
    %c0_0 = arith.constant 0 : index
    %c0_1 = arith.constant 0 : index
    %c0_2 = arith.constant 0 : index
    %0 = vector.load %arg1[%c0, %c0_0, %c0_1, %c0_2] : memref<1x18x18x4xbf16, #tpu.memory_space<vmem>>, vector<1x16x16x4xbf16>
    %1 = vector.shape_cast %0 : vector<1x16x16x4xbf16> to vector<16x16x4xbf16>
    %2 = vector.shape_cast %1 : vector<16x16x4xbf16> to vector<256x4xbf16>
    %c0_3 = arith.constant 0 : index
    %c0_4 = arith.constant 0 : index
    %c1 = arith.constant 1 : index
    %c0_5 = arith.constant 0 : index
    %3 = vector.load %arg1[%c0_3, %c0_4, %c1, %c0_5] : memref<1x18x18x4xbf16, #tpu.memory_space<vmem>>, vector<1x16x16x4xbf16>
    %4 = vector.shape_cast %3 : vector<1x16x16x4xbf16> to vector<16x16x4xbf16>
    %5 = vector.shape_cast %4 : vector<16x16x4xbf16> to vector<256x4xbf16>
    %c0_6 = arith.constant 0 : index
    %c0_7 = arith.constant 0 : index
    %c2 = arith.constant 2 : index
    %c0_8 = arith.constant 0 : index
    %6 = vector.load %arg1[%c0_6, %c0_7, %c2, %c0_8] : memref<1x18x18x4xbf16, #tpu.memory_space<vmem>>, vector<1x16x16x4xbf16>
    %7 = vector.shape_cast %6 : vector<1x16x16x4xbf16> to vector<16x16x4xbf16>
    %8 = vector.shape_cast %7 : vector<16x16x4xbf16> to vector<256x4xbf16>
    %c0_9 = arith.constant 0 : index
    %c1_10 = arith.constant 1 : index
    %c0_11 = arith.constant 0 : index
    %c0_12 = arith.constant 0 : index
    %9 = vector.load %arg1[%c0_9, %c1_10, %c0_11, %c0_12] : memref<1x18x18x4xbf16, #tpu.memory_space<vmem>>, vector<1x16x16x4xbf16>
    %10 = vector.shape_cast %9 : vector<1x16x16x4xbf16> to vector<16x16x4xbf16>
    %11 = vector.shape_cast %10 : vector<16x16x4xbf16> to vector<256x4xbf16>
    %c0_13 = arith.constant 0 : index
    %c1_14 = arith.constant 1 : index
    %c1_15 = arith.constant 1 : index
    %c0_16 = arith.constant 0 : index
    %12 = vector.load %arg1[%c0_13, %c1_14, %c1_15, %c0_16] : memref<1x18x18x4xbf16, #tpu.memory_space<vmem>>, vector<1x16x16x4xbf16>
    %13 = vector.shape_cast %12 : vector<1x16x16x4xbf16> to vector<16x16x4xbf16>
    %14 = vector.shape_cast %13 : vector<16x16x4xbf16> to vector<256x4xbf16>
    %c0_17 = arith.constant 0 : index
    %c1_18 = arith.constant 1 : index
    %c2_19 = arith.constant 2 : index
    %c0_20 = arith.constant 0 : index
    %15 = vector.load %arg1[%c0_17, %c1_18, %c2_19, %c0_20] : memref<1x18x18x4xbf16, #tpu.memory_space<vmem>>, vector<1x16x16x4xbf16>
    %16 = vector.shape_cast %15 : vector<1x16x16x4xbf16> to vector<16x16x4xbf16>
    %17 = vector.shape_cast %16 : vector<16x16x4xbf16> to vector<256x4xbf16>
    %c0_21 = arith.constant 0 : index
    %c2_22 = arith.constant 2 : index
    %c0_23 = arith.constant 0 : index
    %c0_24 = arith.constant 0 : index
    %18 = vector.load %arg1[%c0_21, %c2_22, %c0_23, %c0_24] : memref<1x18x18x4xbf16, #tpu.memory_space<vmem>>, vector<1x16x16x4xbf16>
    %19 = vector.shape_cast %18 : vector<1x16x16x4xbf16> to vector<16x16x4xbf16>
    %20 = vector.shape_cast %19 : vector<16x16x4xbf16> to vector<256x4xbf16>
    %c0_25 = arith.constant 0 : index
    %c2_26 = arith.constant 2 : index
    %c1_27 = arith.constant 1 : index
    %c0_28 = arith.constant 0 : index
    %21 = vector.load %arg1[%c0_25, %c2_26, %c1_27, %c0_28] : memref<1x18x18x4xbf16, #tpu.memory_space<vmem>>, vector<1x16x16x4xbf16>
    %22 = vector.shape_cast %21 : vector<1x16x16x4xbf16> to vector<16x16x4xbf16>
    %23 = vector.shape_cast %22 : vector<16x16x4xbf16> to vector<256x4xbf16>
    %c0_29 = arith.constant 0 : index
    %c2_30 = arith.constant 2 : index
    %c2_31 = arith.constant 2 : index
    %c0_32 = arith.constant 0 : index
    %24 = vector.load %arg1[%c0_29, %c2_30, %c2_31, %c0_32] : memref<1x18x18x4xbf16, #tpu.memory_space<vmem>>, vector<1x16x16x4xbf16>
    %25 = vector.shape_cast %24 : vector<1x16x16x4xbf16> to vector<16x16x4xbf16>
    %26 = vector.shape_cast %25 : vector<16x16x4xbf16> to vector<256x4xbf16>
    %27 = tpu.concatenate %2, %5, %8, %11, %14, %17, %20, %23, %26 in 1 : vector<256x4xbf16>, vector<256x4xbf16>, vector<256x4xbf16>, vector<256x4xbf16>, vector<256x4xbf16>, vector<256x4xbf16>, vector<256x4xbf16>, vector<256x4xbf16>, vector<256x4xbf16> -> vector<256x36xbf16>
    %c0_33 = arith.constant 0 : index
    %c0_34 = arith.constant 0 : index
    %28 = vector.load %arg2[%c0_33, %c0_34] : memref<36x128xbf16, #tpu.memory_space<vmem>>, vector<36x128xbf16>
    %cst = arith.constant dense<0.000000e+00> : vector<256x128xf32>
    %29 = tpu.matmul %27, %28, %cst {dimension_numbers = #tpu.dot_dimension_numbers<[1], [0], [0], [1], [0, 0, 1, 1], [], []>} : vector<256x36xbf16>, vector<36x128xbf16>, vector<256x128xf32> -> vector<256x128xf32>
    %cst_35 = arith.constant dense<0.000000e+00> : vector<128xf32>
    %30 = vector.multi_reduction <add>, %29, %cst_35 [0] : vector<256x128xf32> to vector<128xf32>
    %31 = vector.shape_cast %30 : vector<128xf32> to vector<1x128xf32>
    %c0_36 = arith.constant 0 : index
    %c0_37 = arith.constant 0 : index
    %c0_38 = arith.constant 0 : index
    %32 = vector.load %arg4[%c0_36, %c0_37, %c0_38] : memref<1x1x128xf32, #tpu.memory_space<vmem>>, vector<1x1x128xf32>
    %33 = vector.shape_cast %32 : vector<1x1x128xf32> to vector<1x128xf32>
    %34 = vector.shape_cast %31 : vector<1x128xf32> to vector<1x1x128xf32>
    tpu.vector_store %arg4[%c0_36, %c0_37, %c0_38], %34 {strides = array<i32>} : memref<1x1x128xf32, #tpu.memory_space<vmem>>, vector<1x1x128xf32>,
    %35 = arith.mulf %29, %29 : vector<256x128xf32>
    %cst_39 = arith.constant dense<0.000000e+00> : vector<128xf32>
    %36 = vector.multi_reduction <add>, %35, %cst_39 [0] : vector<256x128xf32> to vector<128xf32>
    %37 = vector.shape_cast %36 : vector<128xf32> to vector<1x128xf32>
    %c0_40 = arith.constant 0 : index
    %c0_41 = arith.constant 0 : index
    %c0_42 = arith.constant 0 : index
    %38 = vector.load %arg5[%c0_40, %c0_41, %c0_42] : memref<1x1x128xf32, #tpu.memory_space<vmem>>, vector<1x1x128xf32>
    %39 = vector.shape_cast %38 : vector<1x1x128xf32> to vector<1x128xf32>
    %40 = vector.shape_cast %37 : vector<1x128xf32> to vector<1x1x128xf32>
    tpu.vector_store %arg5[%c0_40, %c0_41, %c0_42], %40 {strides = array<i32>} : memref<1x1x128xf32, #tpu.memory_space<vmem>>, vector<1x1x128xf32>,
    %41 = tpu.transpose %29, [1, 0] : vector<256x128xf32> -> vector<128x256xf32>
    %42 = vector.extract_strided_slice %41 {offsets = [0, 0], sizes = [8, 256], strides = [1, 1]} : vector<128x256xf32> to vector<8x256xf32>
    %c0_43 = arith.constant 0 : index
    %c0_44 = arith.constant 0 : index
    %c0_45 = arith.constant 0 : index
    %43 = vector.load %arg3[%c0_43, %c0_44, %c0_45] : memref<1x8x256xf32, #tpu.memory_space<vmem>>, vector<1x8x256xf32>
    %44 = vector.shape_cast %43 : vector<1x8x256xf32> to vector<8x256xf32>
    %45 = vector.shape_cast %42 : vector<8x256xf32> to vector<1x8x256xf32>
    tpu.vector_store %arg3[%c0_43, %c0_44, %c0_45], %45 {strides = array<i32>} : memref<1x8x256xf32, #tpu.memory_space<vmem>>, vector<1x8x256xf32>,
    return
  }
  func.func @transform_0(%arg0: i32) -> (i32, i32, i32, i32) {
    %c0_i32 = arith.constant 0 : i32
    %c0_i32_0 = arith.constant 0 : i32
    %c0_i32_1 = arith.constant 0 : i32
    %c0_i32_2 = arith.constant 0 : i32
    return %arg0, %c0_i32, %c0_i32_0, %c0_i32_1 : i32, i32, i32, i32
  }
  func.func @transform_1(%arg0: i32) -> (i32, i32) {
    %c0_i32 = arith.constant 0 : i32
    %c0_i32_0 = arith.constant 0 : i32
    %c0_i32_1 = arith.constant 0 : i32
    return %c0_i32, %c0_i32_0 : i32, i32
  }
  func.func @transform_2(%arg0: i32) -> (i32, i32, i32) {
    %c0_i32 = arith.constant 0 : i32
    %c0_i32_0 = arith.constant 0 : i32
    %c0_i32_1 = arith.constant 0 : i32
    return %arg0, %c0_i32, %c0_i32_0 : i32, i32, i32
  }
  func.func @transform_3(%arg0: i32) -> (i32, i32, i32) {
    %c0_i32 = arith.constant 0 : i32
    %c0_i32_0 = arith.constant 0 : i32
    %c0_i32_1 = arith.constant 0 : i32
    return %arg0, %c0_i32, %c0_i32_0 : i32, i32, i32
  }
  func.func @transform_4(%arg0: i32) -> (i32, i32, i32) {
    %c0_i32 = arith.constant 0 : i32
    %c0_i32_0 = arith.constant 0 : i32
    %c0_i32_1 = arith.constant 0 : i32
    return %arg0, %c0_i32, %c0_i32_0 : i32, i32, i32
  }
}

module attributes {stable_mosaic.version = 11 : i64} {
  func.func @_bn_relu_kernel(%arg0: i32, %arg1: i32, %arg2: memref<16x256xf32, #tpu.memory_space<vmem>>, %arg3: memref<16x1xf32, #tpu.memory_space<vmem>>, %arg4: memref<16x1xf32, #tpu.memory_space<vmem>>, %arg5: memref<16x256xf32, #tpu.memory_space<vmem>>) attributes {dimension_semantics = [#tpu.dimension_semantics<parallel>, #tpu.dimension_semantics<parallel>], iteration_bounds = array<i64: 1, 1>, scalar_prefetch = 0 : i64, scratch_operands = 0 : i64, tpu.core_type = #tpu.core_type<tc>, window_params = [{transform_indices = @transform_0, window_bounds = array<i64: 16, 256>}, {transform_indices = @transform_1, window_bounds = array<i64: 16, 1>}, {transform_indices = @transform_2, window_bounds = array<i64: 16, 1>}, {transform_indices = @transform_3, window_bounds = array<i64: 16, 256>}]} {
    %c0 = arith.constant 0 : index
    %c0_0 = arith.constant 0 : index
    %0 = vector.load %arg2[%c0, %c0_0] : memref<16x256xf32, #tpu.memory_space<vmem>>, vector<16x256xf32>
    %c0_1 = arith.constant 0 : index
    %c0_2 = arith.constant 0 : index
    %1 = vector.load %arg3[%c0_1, %c0_2] : memref<16x1xf32, #tpu.memory_space<vmem>>, vector<16x1xf32>
    %2 = vector.broadcast %1 : vector<16x1xf32> to vector<16x256xf32>
    %3 = arith.mulf %0, %2 : vector<16x256xf32>
    %c0_3 = arith.constant 0 : index
    %c0_4 = arith.constant 0 : index
    %4 = vector.load %arg4[%c0_3, %c0_4] : memref<16x1xf32, #tpu.memory_space<vmem>>, vector<16x1xf32>
    %5 = vector.broadcast %4 : vector<16x1xf32> to vector<16x256xf32>
    %6 = arith.addf %3, %5 : vector<16x256xf32>
    %cst = arith.constant 0.000000e+00 : f32
    %7 = vector.broadcast %cst : f32 to vector<16x256xf32>
    %8 = arith.maximumf %6, %7 : vector<16x256xf32>
    %c0_5 = arith.constant 0 : index
    %c0_6 = arith.constant 0 : index
    %9 = vector.load %arg5[%c0_5, %c0_6] : memref<16x256xf32, #tpu.memory_space<vmem>>, vector<16x256xf32>
    tpu.vector_store %arg5[%c0_5, %c0_6], %8 {strides = array<i32>} : memref<16x256xf32, #tpu.memory_space<vmem>>, vector<16x256xf32>,
    return
  }
  func.func @transform_0(%arg0: i32, %arg1: i32) -> (i32, i32) {
    %c0_i32 = arith.constant 0 : i32
    return %arg0, %arg1 : i32, i32
  }
  func.func @transform_1(%arg0: i32, %arg1: i32) -> (i32, i32) {
    %c0_i32 = arith.constant 0 : i32
    %c0_i32_0 = arith.constant 0 : i32
    return %arg0, %c0_i32 : i32, i32
  }
  func.func @transform_2(%arg0: i32, %arg1: i32) -> (i32, i32) {
    %c0_i32 = arith.constant 0 : i32
    %c0_i32_0 = arith.constant 0 : i32
    return %arg0, %c0_i32 : i32, i32
  }
  func.func @transform_3(%arg0: i32, %arg1: i32) -> (i32, i32) {
    %c0_i32 = arith.constant 0 : i32
    return %arg0, %arg1 : i32, i32
  }
}

</mosaic_0001>

<llo_original>
// kernel: conv_bn_relu_forward.3
$region0: #{conv_bn_relu_forward.3}
  #allocation0 [shape = 'u32[]', space=smem, size = 0x4, offset = 0x4, fixed_abs, tag = 'smem constant byte address 0x4 - core index']
  #allocation1 [shape = 'u32[144,128]{1,0:T(1,128)}', space=vmem, size = 0x12000, scoped, tag = 'internal scratch']
  %s0 = inlined_call_operand.vmem [shape: f32[16,256], index: 0, kind: input, shape index: {}, may-alias: {0,3}]
  %s1 = inlined_call_operand.vmem [shape: f32[16,1], index: 1, kind: input, shape index: {}]
  %s2 = inlined_call_operand.vmem [shape: f32[16,1], index: 2, kind: input, shape index: {}]
  %s3 = inlined_call_operand.vmem [shape: f32[16,256], index: 3, kind: output, shape index: {}, may-alias: {0,3}]
  %s4 = sld [smem:[#allocation0]]
  $region22: #{conv_bn_relu_forward.3} parent=0
    _
  %s6 = ssub.s32 1, %s4
  %s7 = scalar_select 0, %s6, %s4
  // Predicated region
  $region2: #{conv_bn_relu_forward.3} parent=0 // pred_check
    _
  $region3: #{conv_bn_relu_forward.3} parent=0 // pred_check_branch
    %9 = sbr.rel (0) target = $region5
  $region4: #{conv_bn_relu_forward.3} parent=0 // pred_region
    _
  $region5: #{conv_bn_relu_forward.3} parent=0 // pred_fallthru
    _
  // Predicated region
  $region6: #{conv_bn_relu_forward.3} parent=0 // pred_check
    _
  $region7: #{conv_bn_relu_forward.3} parent=0 // pred_check_branch
    %11 = sbr.rel (0) target = $region9
  $region8: #{conv_bn_relu_forward.3} parent=0 // pred_region
    _
  $region9: #{conv_bn_relu_forward.3} parent=0 // pred_fallthru
    _
  // Predicated region
  $region10: #{conv_bn_relu_forward.3} parent=0 // pred_check
    _
  $region11: #{conv_bn_relu_forward.3} parent=0 // pred_check_branch
    %13 = sbr.rel (0) target = $region13
  $region12: #{conv_bn_relu_forward.3} parent=0 // pred_region
    _
  $region13: #{conv_bn_relu_forward.3} parent=0 // pred_fallthru
    _
  %v14 = vld [vmem:[%s0] sm:$0xff]
  %v15 = vld [vmem:[%s0 + $0x8] sm:$0xff]
  %v16 = vld [vmem:[%s0 + $0x10] sm:$0xff]
  %v17 = vld [vmem:[%s0 + $0x18] sm:$0xff]
  %v18 = vld [vmem:[%s1] sm:$0xff]
  %v19 = vld [vmem:[%s1 + $0x8] sm:$0xff]
  %21 = vset.pattern.permute.xlu0 0
  %22 = vperm.xlu0 %21, %v18
  %v23 = vpop.permute.xlu0 %22
  %26 = vset.pattern.permute.xlu0 0
  %27 = vperm.xlu0 %26, %v19
  %v28 = vpop.permute.xlu0 %27
  %v30 = vmul.f32 %v14, %v23
  %v31 = vmul.f32 %v15, %v23
  %v32 = vmul.f32 %v16, %v28
  %v33 = vmul.f32 %v17, %v28
  %v34 = vld [vmem:[%s2] sm:$0xff]
  %v35 = vld [vmem:[%s2 + $0x8] sm:$0xff]
  %37 = vset.pattern.permute.xlu0 0
  %38 = vperm.xlu0 %37, %v34
  %v39 = vpop.permute.xlu0 %38
  %42 = vset.pattern.permute.xlu0 0
  %43 = vperm.xlu0 %42, %v35
  %v44 = vpop.permute.xlu0 %43
  %v46 = vadd.f32 %v30, %v39
  %v47 = vadd.f32 %v31, %v39
  %v48 = vadd.f32 %v32, %v44
  %v49 = vadd.f32 %v33, %v44
  %v50 = vmax.f32 %v46, 0.0
  %v51 = vmax.f32 %v47, 0.0
  %v52 = vmax.f32 %v48, 0.0
  %v53 = vmax.f32 %v49, 0.0
  %54 = vst [vmem:[%s3] sm:$0xff] %v50
  %55 = vst [vmem:[%s3 + $0x8] sm:$0xff] %v51
  %56 = vst [vmem:[%s3 + $0x10] sm:$0xff] %v52
  %57 = vst [vmem:[%s3 + $0x18] sm:$0xff] %v53
  // Predicated region
  $region14: #{conv_bn_relu_forward.3} parent=0 // pred_check
    _
  $region15: #{conv_bn_relu_forward.3} parent=0 // pred_check_branch
    %59 = sbr.rel (0) target = $region17
  $region16: #{conv_bn_relu_forward.3} parent=0 // pred_region
    _
  $region17: #{conv_bn_relu_forward.3} parent=0 // pred_fallthru
    _
  // Predicated region
  $region18: #{conv_bn_relu_forward.3} parent=0 // pred_check
    _
  $region19: #{conv_bn_relu_forward.3} parent=0 // pred_check_branch
    %61 = sbr.rel (0) target = $region21
  $region20: #{conv_bn_relu_forward.3} parent=0 // pred_region
    _
  $region21: #{conv_bn_relu_forward.3} parent=0 // pred_fallthru
    _

// kernel: conv_bn_relu_forward.2
$region0: #{conv_bn_relu_forward.2}
  #allocation0 [shape = 'u32[]', space=smem, size = 0x4, offset = 0x4, fixed_abs, tag = 'smem constant byte address 0x4 - core index']
  #allocation1 [shape = 'u32[144,128]{1,0:T(1,128)}', space=vmem, size = 0x12000, scoped, tag = 'internal scratch']
  %s0 = inlined_call_operand.vmem [shape: bf16[2,18,18,4], index: 0, kind: input, shape index: {}]
  %s1 = inlined_call_operand.vmem [shape: bf16[36,128], index: 1, kind: input, shape index: {}]
  %s2 = inlined_call_operand.vmem [shape: f32[2,8,256], index: 2, kind: output, shape index: {0}]
  %s3 = inlined_call_operand.vmem [shape: f32[2,1,128], index: 3, kind: output, shape index: {1}]
  %s4 = inlined_call_operand.vmem [shape: f32[2,1,128], index: 4, kind: output, shape index: {2}]
  %5 = xla_tuple %s2, %s3, %s4
  %s6 = sld [smem:[#allocation0]]
  $region57: #{conv_bn_relu_forward.2} parent=0
    _
  %s8 = ssub.s32 1, %s6
  %s9 = scalar_select 0, %s8, %s6
  loop: start=0, step=1, limit=4
  $region2: #{conv_bn_relu_forward.2} parent=0 // loop_pre_header
    _
  $region3: #{conv_bn_relu_forward.2} parent=0 // loop_header
    %s11 = sphi 0, %s15
    %p12 = scmp.ge.s32.totalorder %s11, 4
    %s21 = sphi 0, %s23
    %s24 = sphi 0, %s21
    %s25 = sphi 0, %s24
    %s41 = sphi 0, %s25
    %s45 = sphi 0, %s45
    %s47 = sphi 0, %s45
    %s48 = sphi 0, %s47
    %s62 = sphi 0, %s48
    %s68 = sphi 0, %s70
    %s71 = sphi 0, %s68
    %s72 = sphi 0, %s71
    %s88 = sphi 0, %s72
    %s94 = sphi 0, %s96
    %s97 = sphi 0, %s94
    %s98 = sphi 0, %s97
    %s114 = sphi 0, %s98
    %s120 = sphi 0, %s122
    %s123 = sphi 0, %s120
    %s124 = sphi 0, %s123
    %s140 = sphi 0, %s124
  $region4: #{conv_bn_relu_forward.2} parent=0 // loop_header_branch
    %14 = sbr.rel (%p12) target = $region8
  $region5: #{conv_bn_relu_forward.2} parent=0 // loop_body
    %s16 = ssub.s32 %s11, 1
    %s17 = ssub.s32 %s11, 2
    %s18 = sadd.s32 %s11, 1
    %s19 = ssub.s32 %s11, %s18
    %p20 = scmp.eq.s32.totalorder %s19, 0
    %s22 = sadd.s32 %s21, 1
    %s23 = scalar_select %p20, %s21, %s22
    %p26 = pneg %p20
    %p27 = scmp.eq.s32.totalorder %s11, 1
    %p28 = por %p26, %p27
    %p29 = scmp.ne.s32.totalorder %s21, %s24
    %p30 = scmp.eq.s32.totalorder %s11, 0
    %p31 = por %p29, %p30
    %p32 = scmp.ne.s32.totalorder %s21, %s24
    %p33 = scmp.eq.s32.totalorder %s16, 1
    %p34 = por %p32, %p33
    %p35 = scmp.ne.s32.totalorder %s24, %s25
    %p36 = scmp.eq.s32.totalorder %s16, 0
    %p37 = por %p35, %p36
    %p38 = scmp.ne.s32.totalorder %s24, %s25
    %p39 = scmp.eq.s32.totalorder %s17, 1
    %p40 = por %p38, %p39
    %p42 = scmp.ne.s32.totalorder %s25, %s41
    %p43 = scmp.eq.s32.totalorder %s17, 0
    %p44 = por %p42, %p43
    %s46 = sadd.s32 %s45, 1
    %p49 = scmp.eq.s32.totalorder %s11, 1
    %p50 = scmp.ne.s32.totalorder %s45, %s47
    %p51 = scmp.eq.s32.totalorder %s11, 0
    %p52 = por %p50, %p51
    %p53 = scmp.ne.s32.totalorder %s45, %s47
    %p54 = scmp.eq.s32.totalorder %s16, 1
    %p55 = por %p53, %p54
    %p56 = scmp.ne.s32.totalorder %s47, %s48
    %p57 = scmp.eq.s32.totalorder %s16, 0
    %p58 = por %p56, %p57
    %p59 = scmp.ne.s32.totalorder %s47, %s48
    %p60 = scmp.eq.s32.totalorder %s17, 1
    %p61 = por %p59, %p60
    %p63 = scmp.ne.s32.totalorder %s48, %s62
    %p64 = scmp.eq.s32.totalorder %s17, 0
    %p65 = por %p63, %p64
    %s66 = ssub.s32 %s11, %s18
    %p67 = scmp.eq.s32.totalorder %s66, 0
    %s69 = sadd.s32 %s68, 1
    %s70 = scalar_select %p67, %s68, %s69
    %p73 = pneg %p67
    %p74 = scmp.eq.s32.totalorder %s11, 1
    %p75 = por %p73, %p74
    %p76 = scmp.ne.s32.totalorder %s68, %s71
    %p77 = scmp.eq.s32.totalorder %s11, 0
    %p78 = por %p76, %p77
    %p79 = scmp.ne.s32.totalorder %s68, %s71
    %p80 = scmp.eq.s32.totalorder %s16, 1
    %p81 = por %p79, %p80
    %p82 = scmp.ne.s32.totalorder %s71, %s72
    %p83 = scmp.eq.s32.totalorder %s16, 0
    %p84 = por %p82, %p83
    %p85 = scmp.ne.s32.totalorder %s71, %s72
    %p86 = scmp.eq.s32.totalorder %s17, 1
    %p87 = por %p85, %p86
    %p89 = scmp.ne.s32.totalorder %s72, %s88
    %p90 = scmp.eq.s32.totalorder %s17, 0
    %p91 = por %p89, %p90
    %s92 = ssub.s32 %s11, %s18
    %p93 = scmp.eq.s32.totalorder %s92, 0
    %s95 = sadd.s32 %s94, 1
    %s96 = scalar_select %p93, %s94, %s95
    %p99 = pneg %p93
    %p100 = scmp.eq.s32.totalorder %s11, 1
    %p101 = por %p99, %p100
    %p102 = scmp.ne.s32.totalorder %s94, %s97
    %p103 = scmp.eq.s32.totalorder %s11, 0
    %p104 = por %p102, %p103
    %p105 = scmp.ne.s32.totalorder %s94, %s97
    %p106 = scmp.eq.s32.totalorder %s16, 1
    %p107 = por %p105, %p106
    %p108 = scmp.ne.s32.totalorder %s97, %s98
    %p109 = scmp.eq.s32.totalorder %s16, 0
    %p110 = por %p108, %p109
    %p111 = scmp.ne.s32.totalorder %s97, %s98
    %p112 = scmp.eq.s32.totalorder %s17, 1
    %p113 = por %p111, %p112
    %p115 = scmp.ne.s32.totalorder %s98, %s114
    %p116 = scmp.eq.s32.totalorder %s17, 0
    %p117 = por %p115, %p116
    %s118 = ssub.s32 %s11, %s18
    %p119 = scmp.eq.s32.totalorder %s118, 0
    %s121 = sadd.s32 %s120, 1
    %s122 = scalar_select %p119, %s120, %s121
    %p125 = pneg %p119
    %p126 = scmp.eq.s32.totalorder %s11, 1
    %p127 = por %p125, %p126
    %p128 = scmp.ne.s32.totalorder %s120, %s123
    %p129 = scmp.eq.s32.totalorder %s11, 0
    %p130 = por %p128, %p129
    %p131 = scmp.ne.s32.totalorder %s120, %s123
    %p132 = scmp.eq.s32.totalorder %s16, 1
    %p133 = por %p131, %p132
    %p134 = scmp.ne.s32.totalorder %s123, %s124
    %p135 = scmp.eq.s32.totalorder %s16, 0
    %p136 = por %p134, %p135
    %p137 = scmp.ne.s32.totalorder %s123, %s124
    %p138 = scmp.eq.s32.totalorder %s17, 1
    %p139 = por %p137, %p138
    %p141 = scmp.ne.s32.totalorder %s124, %s140
    %p142 = scmp.eq.s32.totalorder %s17, 0
    %p143 = por %p141, %p142
    %p144 = scmp.le.s32.totalorder 1, %s11
    %p145 = scmp.lt.s32.totalorder %s11, 3
    %p146 = pnand %p144, %p145
    %p147 = pneg %p146
    // Predicated region
    $region9: #{conv_bn_relu_forward.2} parent=5 // pred_check
      _
    $region10: #{conv_bn_relu_forward.2} parent=5 // pred_check_branch
      %149 = sbr.rel (%p146) target = $region12
    $region11: #{conv_bn_relu_forward.2} parent=5 // pred_region
      %s150 = ssub.s32 %s11, 1
      // Predicated region
      $region13: #{conv_bn_relu_forward.2} parent=11 // pred_check
        %p151 = pneg %p58
      $region14: #{conv_bn_relu_forward.2} parent=11 // pred_check_branch
        %153 = sbr.rel (%p151) target = $region16
      $region15: #{conv_bn_relu_forward.2} parent=11 // pred_region
        _
      $region16: #{conv_bn_relu_forward.2} parent=11 // pred_fallthru
        _
    $region12: #{conv_bn_relu_forward.2} parent=5 // pred_fallthru
      _
    %p154 = scmp.lt.s32.totalorder %s11, 2
    // Predicated region
    $region17: #{conv_bn_relu_forward.2} parent=5 // pred_check
      %p155 = pneg %p154
    $region18: #{conv_bn_relu_forward.2} parent=5 // pred_check_branch
      %157 = sbr.rel (%p155) target = $region20
    $region19: #{conv_bn_relu_forward.2} parent=5 // pred_region
      // Predicated region
      $region21: #{conv_bn_relu_forward.2} parent=19 // pred_check
        %p158 = pneg %p31
      $region22: #{conv_bn_relu_forward.2} parent=19 // pred_check_branch
        %160 = sbr.rel (%p158) target = $region24
      $region23: #{conv_bn_relu_forward.2} parent=19 // pred_region
        %p161 = scmp.lt.s32.totalorder %s11, 1
        %s162 = scalar_select %p161, %s11, 1
        %s163 = smul.addr %s162, 54
        %s164 = smul.addr %s163, 4
        %s165 = scalar_lea.vmem %s0, %s164
      $region24: #{conv_bn_relu_forward.2} parent=19 // pred_fallthru
        _
    $region20: #{conv_bn_relu_forward.2} parent=5 // pred_fallthru
      _
    %p166 = scmp.le.s32.totalorder 1, %s11
    %p167 = scmp.lt.s32.totalorder %s11, 3
    %p168 = pnand %p166, %p167
    %p169 = pneg %p168
    // Predicated region
    $region25: #{conv_bn_relu_forward.2} parent=5 // pred_check
      _
    $region26: #{conv_bn_relu_forward.2} parent=5 // pred_check_branch
      %171 = sbr.rel (%p168) target = $region28
    $region27: #{conv_bn_relu_forward.2} parent=5 // pred_region
      %s172 = ssub.s32 %s11, 1
      %p173 = scmp.lt.s32.totalorder %s16, 1
      %s174 = scalar_select %p173, %s16, 1
      %s175 = smul.addr %s174, 54
      %s176 = smul.addr %s175, 4
      %s177 = scalar_lea.vmem %s0, %s176
      %p178 = pneg %p37
      %p179 = pneg %p34
      %p180 = pneg %p58
      %p181 = pneg %p55
      %p182 = pneg %p84
      %p183 = pneg %p81
      %p184 = scmp.lt.s32.totalorder %s16, 1
      %s185 = scalar_select %p184, %s16, 1
      %s186 = smul.addr %s185, 2
      %s187 = smul.addr %s186, 8
      %s188 = scalar_lea.vmem %s2, %s187
      %p189 = pneg %p110
      %p190 = pneg %p107
      %p191 = scmp.lt.s32.totalorder %s16, 1
      %s192 = scalar_select %p191, %s16, 1
      %s193 = scalar_lea.vmem %s3, %s192
      %p194 = pneg %p136
      %p195 = pneg %p133
      %p196 = scmp.lt.s32.totalorder %s16, 1
      %s197 = scalar_select %p196, %s16, 1
      %s198 = scalar_lea.vmem %s4, %s197
      %p199 = scmp.lt.s32.totalorder %s16, 1
      %s200 = scalar_select %p199, %s16, 1
      %s201 = smul.addr %s200, 54
      %s202 = smul.addr %s201, 4
      %s203 = scalar_lea.vmem %s0, %s202
      %p204 = scmp.lt.s32.totalorder %s16, 1
      %s205 = scalar_select %p204, %s16, 1
      %s206 = smul.addr %s205, 2
      %s207 = smul.addr %s206, 8
      %s208 = scalar_lea.vmem %s2, %s207
      %p209 = scmp.lt.s32.totalorder %s16, 1
      %s210 = scalar_select %p209, %s16, 1
      %s211 = scalar_lea.vmem %s3, %s210
      %p212 = scmp.lt.s32.totalorder %s16, 1
      %s213 = scalar_select %p212, %s16, 1
      %s214 = scalar_lea.vmem %s4, %s213
      %v216 = vld [vmem:[%s203] sm:$0xf]
      %v217 = vld [vmem:[%s203 + $0x4] sm:$0xf]
      %v218 = vld [vmem:[%s203 + $0xc] sm:$0xf]
      %v219 = vld [vmem:[%s203 + $0x10] sm:$0xf]
      %v220 = vld [vmem:[%s203 + $0x18] sm:$0xf]
      %v221 = vld [vmem:[%s203 + $0x1c] sm:$0xf]
      %v222 = vld [vmem:[%s203 + $0x24] sm:$0xf]
      %v223 = vld [vmem:[%s203 + $0x28] sm:$0xf]
      %v224 = vld [vmem:[%s203 + $0x30] sm:$0xf]
      %v225 = vld [vmem:[%s203 + $0x34] sm:$0xf]
      %v226 = vld [vmem:[%s203 + $0x3c] sm:$0xf]
      %v227 = vld [vmem:[%s203 + $0x40] sm:$0xf]
      %v228 = vld [vmem:[%s203 + $0x48] sm:$0xf]
      %v229 = vld [vmem:[%s203 + $0x4c] sm:$0xf]
      %v230 = vld [vmem:[%s203 + $0x54] sm:$0xf]
      %v231 = vld [vmem:[%s203 + $0x58] sm:$0xf]
      %v232 = vld [vmem:[%s203 + $0x60] sm:$0xf]
      %v233 = vld [vmem:[%s203 + $0x64] sm:$0xf]
      %v234 = vld [vmem:[%s203 + $0x6c] sm:$0xf]
      %v235 = vld [vmem:[%s203 + $0x70] sm:$0xf]
      %v236 = vld [vmem:[%s203 + $0x78] sm:$0xf]
      %v237 = vld [vmem:[%s203 + $0x7c] sm:$0xf]
      %v238 = vld [vmem:[%s203 + $0x84] sm:$0xf]
      %v239 = vld [vmem:[%s203 + $0x88] sm:$0xf]
      %v240 = vld [vmem:[%s203 + $0x90] sm:$0xf]
      %v241 = vld [vmem:[%s203 + $0x94] sm:$0xf]
      %v242 = vld [vmem:[%s203 + $0x9c] sm:$0xf]
      %v243 = vld [vmem:[%s203 + $0xa0] sm:$0xf]
      %v244 = vld [vmem:[%s203 + $0xa8] sm:$0xf]
      %v245 = vld [vmem:[%s203 + $0xac] sm:$0xf]
      %v246 = vld [vmem:[%s203 + $0xb4] sm:$0xf]
      %v247 = vld [vmem:[%s203 + $0xb8] sm:$0xf]
      %v248 = vld [vmem:[%s203 + $0x8] sm:$0x1]
      %v249 = vld [vmem:[%s203 + $0x14] sm:$0x1]
      %v250 = vld [vmem:[%s203 + $0x20] sm:$0x1]
      %v251 = vld [vmem:[%s203 + $0x2c] sm:$0x1]
      %v252 = vld [vmem:[%s203 + $0x38] sm:$0x1]
      %v253 = vld [vmem:[%s203 + $0x44] sm:$0x1]
      %v254 = vld [vmem:[%s203 + $0x50] sm:$0x1]
      %v255 = vld [vmem:[%s203 + $0x5c] sm:$0x1]
      %v256 = vld [vmem:[%s203 + $0x68] sm:$0x1]
      %v257 = vld [vmem:[%s203 + $0x74] sm:$0x1]
      %v258 = vld [vmem:[%s203 + $0x80] sm:$0x1]
      %v259 = vld [vmem:[%s203 + $0x8c] sm:$0x1]
      %v260 = vld [vmem:[%s203 + $0x98] sm:$0x1]
      %v261 = vld [vmem:[%s203 + $0xa4] sm:$0x1]
      %v262 = vld [vmem:[%s203 + $0xb0] sm:$0x1]
      %v263 = vld [vmem:[%s203 + $0xbc] sm:$0x1]
      %vm264 = vsmask.f32 3328
      %vm265 = vsmask.f32 7440
      %vm266 = vmor %vm264, %vm265
      %v268 = vshrl.u32 %v216, 16
      %v270 = vrot.slane %v268, 4
      %v271 = vshll.u32 %v216, 16
      %v273 = vrot.slane %v271, 5
      %v274 = vor.u32 %v270, %v273
      %v275 = vrot.slane %v274, 4
      %v277 = vshll.u32 %v217, 16
      %v279 = vrot.slane %v277, 5
      %v280 = vsel %vm266, %v275, %v279
      %v281 = vshrl.u32 %v217, 16
      %v283 = vrot.slane %v281, 4
      %v284 = vor.u32 %v283, %v279
      %v285 = vrot.slane %v284, 4
      %v287 = vshll.u32 %v248, 16
      %v289 = vrot.slane %v287, 5
      %v290 = vsel %vm266, %v285, %v289
      %v292 = vshrl.u32 %v218, 16
      %v294 = vrot.slane %v292, 4
      %v295 = vshll.u32 %v218, 16
      %v297 = vrot.slane %v295, 5
      %v298 = vor.u32 %v294, %v297
      %v299 = vrot.slane %v298, 4
      %v301 = vshll.u32 %v219, 16
      %v303 = vrot.slane %v301, 5
      %v304 = vsel %vm266, %v299, %v303
      %v305 = vshrl.u32 %v219, 16
      %v307 = vrot.slane %v305, 4
      %v308 = vor.u32 %v307, %v303
      %v309 = vrot.slane %v308, 4
      %v311 = vshll.u32 %v249, 16
      %v313 = vrot.slane %v311, 5
      %v314 = vsel %vm266, %v309, %v313
      %v316 = vshrl.u32 %v220, 16
      %v318 = vrot.slane %v316, 4
      %v319 = vshll.u32 %v220, 16
      %v321 = vrot.slane %v319, 5
      %v322 = vor.u32 %v318, %v321
      %v323 = vrot.slane %v322, 4
      %v325 = vshll.u32 %v221, 16
      %v327 = vrot.slane %v325, 5
      %v328 = vsel %vm266, %v323, %v327
      %v329 = vshrl.u32 %v221, 16
      %v331 = vrot.slane %v329, 4
      %v332 = vor.u32 %v331, %v327
      %v333 = vrot.slane %v332, 4
      %v335 = vshll.u32 %v250, 16
      %v337 = vrot.slane %v335, 5
      %v338 = vsel %vm266, %v333, %v337
      %v340 = vshrl.u32 %v222, 16
      %v342 = vrot.slane %v340, 4
      %v343 = vshll.u32 %v222, 16
      %v345 = vrot.slane %v343, 5
      %v346 = vor.u32 %v342, %v345
      %v347 = vrot.slane %v346, 4
      %v349 = vshll.u32 %v223, 16
      %v351 = vrot.slane %v349, 5
      %v352 = vsel %vm266, %v347, %v351
      %v353 = vshrl.u32 %v223, 16
      %v355 = vrot.slane %v353, 4
      %v356 = vor.u32 %v355, %v351
      %v357 = vrot.slane %v356, 4
      %v359 = vshll.u32 %v251, 16
      %v361 = vrot.slane %v359, 5
      %v362 = vsel %vm266, %v357, %v361
      %v364 = vshrl.u32 %v224, 16
      %v366 = vrot.slane %v364, 4
      %v367 = vshll.u32 %v224, 16
      %v369 = vrot.slane %v367, 5
      %v370 = vor.u32 %v366, %v369
      %v371 = vrot.slane %v370, 4
      %v373 = vshll.u32 %v225, 16
      %v375 = vrot.slane %v373, 5
      %v376 = vsel %vm266, %v371, %v375
      %v377 = vshrl.u32 %v225, 16
      %v379 = vrot.slane %v377, 4
      %v380 = vor.u32 %v379, %v375
      %v381 = vrot.slane %v380, 4
      %v383 = vshll.u32 %v252, 16
      %v385 = vrot.slane %v383, 5
      %v386 = vsel %vm266, %v381, %v385
      %v388 = vshrl.u32 %v226, 16
      %v390 = vrot.slane %v388, 4
      %v391 = vshll.u32 %v226, 16
      %v393 = vrot.slane %v391, 5
      %v394 = vor.u32 %v390, %v393
      %v395 = vrot.slane %v394, 4
      %v397 = vshll.u32 %v227, 16
      %v399 = vrot.slane %v397, 5
      %v400 = vsel %vm266, %v395, %v399
      %v401 = vshrl.u32 %v227, 16
      %v403 = vrot.slane %v401, 4
      %v404 = vor.u32 %v403, %v399
      %v405 = vrot.slane %v404, 4
      %v407 = vshll.u32 %v253, 16
      %v409 = vrot.slane %v407, 5
      %v410 = vsel %vm266, %v405, %v409
      %v412 = vshrl.u32 %v228, 16
      %v414 = vrot.slane %v412, 4
      %v415 = vshll.u32 %v228, 16
      %v417 = vrot.slane %v415, 5
      %v418 = vor.u32 %v414, %v417
      %v419 = vrot.slane %v418, 4
      %v421 = vshll.u32 %v229, 16
      %v423 = vrot.slane %v421, 5
      %v424 = vsel %vm266, %v419, %v423
      %v425 = vshrl.u32 %v229, 16
      %v427 = vrot.slane %v425, 4
      %v428 = vor.u32 %v427, %v423
      %v429 = vrot.slane %v428, 4
      %v431 = vshll.u32 %v254, 16
      %v433 = vrot.slane %v431, 5
      %v434 = vsel %vm266, %v429, %v433
      %v436 = vshrl.u32 %v230, 16
      %v438 = vrot.slane %v436, 4
      %v439 = vshll.u32 %v230, 16
      %v441 = vrot.slane %v439, 5
      %v442 = vor.u32 %v438, %v441
      %v443 = vrot.slane %v442, 4
      %v445 = vshll.u32 %v231, 16
      %v447 = vrot.slane %v445, 5
      %v448 = vsel %vm266, %v443, %v447
      %v449 = vshrl.u32 %v231, 16
      %v451 = vrot.slane %v449, 4
      %v452 = vor.u32 %v451, %v447
      %v453 = vrot.slane %v452, 4
      %v455 = vshll.u32 %v255, 16
      %v457 = vrot.slane %v455, 5
      %v458 = vsel %vm266, %v453, %v457
      %v460 = vshrl.u32 %v232, 16
      %v462 = vrot.slane %v460, 4
      %v463 = vshll.u32 %v232, 16
      %v465 = vrot.slane %v463, 5
      %v466 = vor.u32 %v462, %v465
      %v467 = vrot.slane %v466, 4
      %v469 = vshll.u32 %v233, 16
      %v471 = vrot.slane %v469, 5
      %v472 = vsel %vm266, %v467, %v471
      %v473 = vshrl.u32 %v233, 16
      %v475 = vrot.slane %v473, 4
      %v476 = vor.u32 %v475, %v471
      %v477 = vrot.slane %v476, 4
      %v479 = vshll.u32 %v256, 16
      %v481 = vrot.slane %v479, 5
      %v482 = vsel %vm266, %v477, %v481
      %v484 = vshrl.u32 %v234, 16
      %v486 = vrot.slane %v484, 4
      %v487 = vshll.u32 %v234, 16
      %v489 = vrot.slane %v487, 5
      %v490 = vor.u32 %v486, %v489
      %v491 = vrot.slane %v490, 4
      %v493 = vshll.u32 %v235, 16
      %v495 = vrot.slane %v493, 5
      %v496 = vsel %vm266, %v491, %v495
      %v497 = vshrl.u32 %v235, 16
      %v499 = vrot.slane %v497, 4
      %v500 = vor.u32 %v499, %v495
      %v501 = vrot.slane %v500, 4
      %v503 = vshll.u32 %v257, 16
      %v505 = vrot.slane %v503, 5
      %v506 = vsel %vm266, %v501, %v505
      %v508 = vshrl.u32 %v236, 16
      %v510 = vrot.slane %v508, 4
      %v511 = vshll.u32 %v236, 16
      %v513 = vrot.slane %v511, 5
      %v514 = vor.u32 %v510, %v513
      %v515 = vrot.slane %v514, 4
      %v517 = vshll.u32 %v237, 16
      %v519 = vrot.slane %v517, 5
      %v520 = vsel %vm266, %v515, %v519
      %v521 = vshrl.u32 %v237, 16
      %v523 = vrot.slane %v521, 4
      %v524 = vor.u32 %v523, %v519
      %v525 = vrot.slane %v524, 4
      %v527 = vshll.u32 %v258, 16
      %v529 = vrot.slane %v527, 5
      %v530 = vsel %vm266, %v525, %v529
      %v532 = vshrl.u32 %v238, 16
      %v534 = vrot.slane %v532, 4
      %v535 = vshll.u32 %v238, 16
      %v537 = vrot.slane %v535, 5
      %v538 = vor.u32 %v534, %v537
      %v539 = vrot.slane %v538, 4
      %v541 = vshll.u32 %v239, 16
      %v543 = vrot.slane %v541, 5
      %v544 = vsel %vm266, %v539, %v543
      %v545 = vshrl.u32 %v239, 16
      %v547 = vrot.slane %v545, 4
      %v548 = vor.u32 %v547, %v543
      %v549 = vrot.slane %v548, 4
      %v551 = vshll.u32 %v259, 16
      %v553 = vrot.slane %v551, 5
      %v554 = vsel %vm266, %v549, %v553
      %v556 = vshrl.u32 %v240, 16
      %v558 = vrot.slane %v556, 4
      %v559 = vshll.u32 %v240, 16
      %v561 = vrot.slane %v559, 5
      %v562 = vor.u32 %v558, %v561
      %v563 = vrot.slane %v562, 4
      %v565 = vshll.u32 %v241, 16
      %v567 = vrot.slane %v565, 5
      %v568 = vsel %vm266, %v563, %v567
      %v569 = vshrl.u32 %v241, 16
      %v571 = vrot.slane %v569, 4
      %v572 = vor.u32 %v571, %v567
      %v573 = vrot.slane %v572, 4
      %v575 = vshll.u32 %v260, 16
      %v577 = vrot.slane %v575, 5
      %v578 = vsel %vm266, %v573, %v577
      %v580 = vshrl.u32 %v242, 16
      %v582 = vrot.slane %v580, 4
      %v583 = vshll.u32 %v242, 16
      %v585 = vrot.slane %v583, 5
      %v586 = vor.u32 %v582, %v585
      %v587 = vrot.slane %v586, 4
      %v589 = vshll.u32 %v243, 16
      %v591 = vrot.slane %v589, 5
      %v592 = vsel %vm266, %v587, %v591
      %v593 = vshrl.u32 %v243, 16
      %v595 = vrot.slane %v593, 4
      %v596 = vor.u32 %v595, %v591
      %v597 = vrot.slane %v596, 4
      %v599 = vshll.u32 %v261, 16
      %v601 = vrot.slane %v599, 5
      %v602 = vsel %vm266, %v597, %v601
      %v604 = vshrl.u32 %v244, 16
      %v606 = vrot.slane %v604, 4
      %v607 = vshll.u32 %v244, 16
      %v609 = vrot.slane %v607, 5
      %v610 = vor.u32 %v606, %v609
      %v611 = vrot.slane %v610, 4
      %v613 = vshll.u32 %v245, 16
      %v615 = vrot.slane %v613, 5
      %v616 = vsel %vm266, %v611, %v615
      %v617 = vshrl.u32 %v245, 16
      %v619 = vrot.slane %v617, 4
      %v620 = vor.u32 %v619, %v615
      %v621 = vrot.slane %v620, 4
      %v623 = vshll.u32 %v262, 16
      %v625 = vrot.slane %v623, 5
      %v626 = vsel %vm266, %v621, %v625
      %v628 = vshrl.u32 %v246, 16
      %v630 = vrot.slane %v628, 4
      %v631 = vshll.u32 %v246, 16
      %v633 = vrot.slane %v631, 5
      %v634 = vor.u32 %v630, %v633
      %v635 = vrot.slane %v634, 4
      %v637 = vshll.u32 %v247, 16
      %v639 = vrot.slane %v637, 5
      %v640 = vsel %vm266, %v635, %v639
      %v641 = vshrl.u32 %v247, 16
      %v643 = vrot.slane %v641, 4
      %v644 = vor.u32 %v643, %v639
      %v645 = vrot.slane %v644, 4
      %v647 = vshll.u32 %v263, 16
      %v649 = vrot.slane %v647, 5
      %v650 = vsel %vm266, %v645, %v649
      %v651 = vld [vmem:[%s203] sm:$0xe]
      %v652 = vld [vmem:[%s203 + $0xc] sm:$0xe]
      %v653 = vld [vmem:[%s203 + $0x18] sm:$0xe]
      %v654 = vld [vmem:[%s203 + $0x24] sm:$0xe]
      %v655 = vld [vmem:[%s203 + $0x30] sm:$0xe]
      %v656 = vld [vmem:[%s203 + $0x3c] sm:$0xe]
      %v657 = vld [vmem:[%s203 + $0x48] sm:$0xe]
      %v658 = vld [vmem:[%s203 + $0x54] sm:$0xe]
      %v659 = vld [vmem:[%s203 + $0x60] sm:$0xe]
      %v660 = vld [vmem:[%s203 + $0x6c] sm:$0xe]
      %v661 = vld [vmem:[%s203 + $0x78] sm:$0xe]
      %v662 = vld [vmem:[%s203 + $0x84] sm:$0xe]
      %v663 = vld [vmem:[%s203 + $0x90] sm:$0xe]
      %v664 = vld [vmem:[%s203 + $0x9c] sm:$0xe]
      %v665 = vld [vmem:[%s203 + $0xa8] sm:$0xe]
      %v666 = vld [vmem:[%s203 + $0xb4] sm:$0xe]
      %vm715 = vcmask 1042432
      %vm716 = vcmask 1046532
      %vm717 = vmor %vm715, %vm716
      %v718 = vrot.slane %v651, 5
      %v719 = vrot.slane %v718, 4
      %v720 = vrot.slane %v217, 5
      %v721 = vsel %vm717, %v719, %v720
      %v722 = vrot.slane %v720, 4
      %v723 = vrot.slane %v248, 5
      %v724 = vsel %vm717, %v722, %v723
      %v725 = vrot.slane %v652, 5
      %v726 = vrot.slane %v725, 4
      %v727 = vrot.slane %v219, 5
      %v728 = vsel %vm717, %v726, %v727
      %v729 = vrot.slane %v727, 4
      %v730 = vrot.slane %v249, 5
      %v731 = vsel %vm717, %v729, %v730
      %v732 = vrot.slane %v653, 5
      %v733 = vrot.slane %v732, 4
      %v734 = vrot.slane %v221, 5
      %v735 = vsel %vm717, %v733, %v734
      %v736 = vrot.slane %v734, 4
      %v737 = vrot.slane %v250, 5
      %v738 = vsel %vm717, %v736, %v737
      %v739 = vrot.slane %v654, 5
      %v740 = vrot.slane %v739, 4
      %v741 = vrot.slane %v223, 5
      %v742 = vsel %vm717, %v740, %v741
      %v743 = vrot.slane %v741, 4
      %v744 = vrot.slane %v251, 5
      %v745 = vsel %vm717, %v743, %v744
      %v746 = vrot.slane %v655, 5
      %v747 = vrot.slane %v746, 4
      %v748 = vrot.slane %v225, 5
      %v749 = vsel %vm717, %v747, %v748
      %v750 = vrot.slane %v748, 4
      %v751 = vrot.slane %v252, 5
      %v752 = vsel %vm717, %v750, %v751
      %v753 = vrot.slane %v656, 5
      %v754 = vrot.slane %v753, 4
      %v755 = vrot.slane %v227, 5
      %v756 = vsel %vm717, %v754, %v755
      %v757 = vrot.slane %v755, 4
      %v758 = vrot.slane %v253, 5
      %v759 = vsel %vm717, %v757, %v758
      %v760 = vrot.slane %v657, 5
      %v761 = vrot.slane %v760, 4
      %v762 = vrot.slane %v229, 5
      %v763 = vsel %vm717, %v761, %v762
      %v764 = vrot.slane %v762, 4
      %v765 = vrot.slane %v254, 5
      %v766 = vsel %vm717, %v764, %v765
      %v767 = vrot.slane %v658, 5
      %v768 = vrot.slane %v767, 4
      %v769 = vrot.slane %v231, 5
      %v770 = vsel %vm717, %v768, %v769
      %v771 = vrot.slane %v769, 4
      %v772 = vrot.slane %v255, 5
      %v773 = vsel %vm717, %v771, %v772
      %v774 = vrot.slane %v659, 5
      %v775 = vrot.slane %v774, 4
      %v776 = vrot.slane %v233, 5
      %v777 = vsel %vm717, %v775, %v776
      %v778 = vrot.slane %v776, 4
      %v779 = vrot.slane %v256, 5
      %v780 = vsel %vm717, %v778, %v779
      %v781 = vrot.slane %v660, 5
      %v782 = vrot.slane %v781, 4
      %v783 = vrot.slane %v235, 5
      %v784 = vsel %vm717, %v782, %v783
      %v785 = vrot.slane %v783, 4
      %v786 = vrot.slane %v257, 5
      %v787 = vsel %vm717, %v785, %v786
      %v788 = vrot.slane %v661, 5
      %v789 = vrot.slane %v788, 4
      %v790 = vrot.slane %v237, 5
      %v791 = vsel %vm717, %v789, %v790
      %v792 = vrot.slane %v790, 4
      %v793 = vrot.slane %v258, 5
      %v794 = vsel %vm717, %v792, %v793
      %v795 = vrot.slane %v662, 5
      %v796 = vrot.slane %v795, 4
      %v797 = vrot.slane %v239, 5
      %v798 = vsel %vm717, %v796, %v797
      %v799 = vrot.slane %v797, 4
      %v800 = vrot.slane %v259, 5
      %v801 = vsel %vm717, %v799, %v800
      %v802 = vrot.slane %v663, 5
      %v803 = vrot.slane %v802, 4
      %v804 = vrot.slane %v241, 5
      %v805 = vsel %vm717, %v803, %v804
      %v806 = vrot.slane %v804, 4
      %v807 = vrot.slane %v260, 5
      %v808 = vsel %vm717, %v806, %v807
      %v809 = vrot.slane %v664, 5
      %v810 = vrot.slane %v809, 4
      %v811 = vrot.slane %v243, 5
      %v812 = vsel %vm717, %v810, %v811
      %v813 = vrot.slane %v811, 4
      %v814 = vrot.slane %v261, 5
      %v815 = vsel %vm717, %v813, %v814
      %v816 = vrot.slane %v665, 5
      %v817 = vrot.slane %v816, 4
      %v818 = vrot.slane %v245, 5
      %v819 = vsel %vm717, %v817, %v818
      %v820 = vrot.slane %v818, 4
      %v821 = vrot.slane %v262, 5
      %v822 = vsel %vm717, %v820, %v821
      %v823 = vrot.slane %v666, 5
      %v824 = vrot.slane %v823, 4
      %v825 = vrot.slane %v247, 5
      %v826 = vsel %vm717, %v824, %v825
      %v827 = vrot.slane %v825, 4
      %v828 = vrot.slane %v263, 5
      %v829 = vsel %vm717, %v827, %v828
      %s830 = scalar_lea.vmem %s203, 12
      %v831 = vld [vmem:[%s830] sm:$0xf]
      %v832 = vld [vmem:[%s830 + $0x4] sm:$0xf]
      %v833 = vld [vmem:[%s830 + $0xc] sm:$0xf]
      %v834 = vld [vmem:[%s830 + $0x10] sm:$0xf]
      %v835 = vld [vmem:[%s830 + $0x18] sm:$0xf]
      %v836 = vld [vmem:[%s830 + $0x1c] sm:$0xf]
      %v837 = vld [vmem:[%s830 + $0x24] sm:$0xf]
      %v838 = vld [vmem:[%s830 + $0x28] sm:$0xf]
      %v839 = vld [vmem:[%s830 + $0x30] sm:$0xf]
      %v840 = vld [vmem:[%s830 + $0x34] sm:$0xf]
      %v841 = vld [vmem:[%s830 + $0x3c] sm:$0xf]
      %v842 = vld [vmem:[%s830 + $0x40] sm:$0xf]
      %v843 = vld [vmem:[%s830 + $0x48] sm:$0xf]
      %v844 = vld [vmem:[%s830 + $0x4c] sm:$0xf]
      %v845 = vld [vmem:[%s830 + $0x54] sm:$0xf]
      %v846 = vld [vmem:[%s830 + $0x58] sm:$0xf]
      %v847 = vld [vmem:[%s830 + $0x60] sm:$0xf]
      %v848 = vld [vmem:[%s830 + $0x64] sm:$0xf]
      %v849 = vld [vmem:[%s830 + $0x6c] sm:$0xf]
      %v850 = vld [vmem:[%s830 + $0x70] sm:$0xf]
      %v851 = vld [vmem:[%s830 + $0x78] sm:$0xf]
      %v852 = vld [vmem:[%s830 + $0x7c] sm:$0xf]
      %v853 = vld [vmem:[%s830 + $0x84] sm:$0xf]
      %v854 = vld [vmem:[%s830 + $0x88] sm:$0xf]
      %v855 = vld [vmem:[%s830 + $0x90] sm:$0xf]
      %v856 = vld [vmem:[%s830 + $0x94] sm:$0xf]
      %v857 = vld [vmem:[%s830 + $0x9c] sm:$0xf]
      %v858 = vld [vmem:[%s830 + $0xa0] sm:$0xf]
      %v859 = vld [vmem:[%s830 + $0xa8] sm:$0xf]
      %v860 = vld [vmem:[%s830 + $0xac] sm:$0xf]
      %v861 = vld [vmem:[%s830 + $0xb4] sm:$0xf]
      %v862 = vld [vmem:[%s830 + $0xb8] sm:$0xf]
      %v863 = vld [vmem:[%s830 + $0x8] sm:$0x1]
      %v864 = vld [vmem:[%s830 + $0x14] sm:$0x1]
      %v865 = vld [vmem:[%s830 + $0x20] sm:$0x1]
      %v866 = vld [vmem:[%s830 + $0x2c] sm:$0x1]
      %v867 = vld [vmem:[%s830 + $0x38] sm:$0x1]
      %v868 = vld [vmem:[%s830 + $0x44] sm:$0x1]
      %v869 = vld [vmem:[%s830 + $0x50] sm:$0x1]
      %v870 = vld [vmem:[%s830 + $0x5c] sm:$0x1]
      %v871 = vld [vmem:[%s830 + $0x68] sm:$0x1]
      %v872 = vld [vmem:[%s830 + $0x74] sm:$0x1]
      %v873 = vld [vmem:[%s830 + $0x80] sm:$0x1]
      %v874 = vld [vmem:[%s830 + $0x8c] sm:$0x1]
      %v875 = vld [vmem:[%s830 + $0x98] sm:$0x1]
      %v876 = vld [vmem:[%s830 + $0xa4] sm:$0x1]
      %v877 = vld [vmem:[%s830 + $0xb0] sm:$0x1]
      %v878 = vld [vmem:[%s830 + $0xbc] sm:$0x1]
      %v880 = vshrl.u32 %v831, 16
      %v882 = vrot.slane %v880, 4
      %v883 = vshll.u32 %v831, 16
      %v885 = vrot.slane %v883, 5
      %v886 = vor.u32 %v882, %v885
      %v887 = vrot.slane %v886, 4
      %v889 = vshll.u32 %v832, 16
      %v891 = vrot.slane %v889, 5
      %v892 = vsel %vm266, %v887, %v891
      %v893 = vshrl.u32 %v832, 16
      %v895 = vrot.slane %v893, 4
      %v896 = vor.u32 %v895, %v891
      %v897 = vrot.slane %v896, 4
      %v899 = vshll.u32 %v863, 16
      %v901 = vrot.slane %v899, 5
      %v902 = vsel %vm266, %v897, %v901
      %v904 = vshrl.u32 %v833, 16
      %v906 = vrot.slane %v904, 4
      %v907 = vshll.u32 %v833, 16
      %v909 = vrot.slane %v907, 5
      %v910 = vor.u32 %v906, %v909
      %v911 = vrot.slane %v910, 4
      %v913 = vshll.u32 %v834, 16
      %v915 = vrot.slane %v913, 5
      %v916 = vsel %vm266, %v911, %v915
      %v917 = vshrl.u32 %v834, 16
      %v919 = vrot.slane %v917, 4
      %v920 = vor.u32 %v919, %v915
      %v921 = vrot.slane %v920, 4
      %v923 = vshll.u32 %v864, 16
      %v925 = vrot.slane %v923, 5
      %v926 = vsel %vm266, %v921, %v925
      %v928 = vshrl.u32 %v835, 16
      %v930 = vrot.slane %v928, 4
      %v931 = vshll.u32 %v835, 16
      %v933 = vrot.slane %v931, 5
      %v934 = vor.u32 %v930, %v933
      %v935 = vrot.slane %v934, 4
      %v937 = vshll.u32 %v836, 16
      %v939 = vrot.slane %v937, 5
      %v940 = vsel %vm266, %v935, %v939
      %v941 = vshrl.u32 %v836, 16
      %v943 = vrot.slane %v941, 4
      %v944 = vor.u32 %v943, %v939
      %v945 = vrot.slane %v944, 4
      %v947 = vshll.u32 %v865, 16
      %v949 = vrot.slane %v947, 5
      %v950 = vsel %vm266, %v945, %v949
      %v952 = vshrl.u32 %v837, 16
      %v954 = vrot.slane %v952, 4
      %v955 = vshll.u32 %v837, 16
      %v957 = vrot.slane %v955, 5
      %v958 = vor.u32 %v954, %v957
      %v959 = vrot.slane %v958, 4
      %v961 = vshll.u32 %v838, 16
      %v963 = vrot.slane %v961, 5
      %v964 = vsel %vm266, %v959, %v963
      %v965 = vshrl.u32 %v838, 16
      %v967 = vrot.slane %v965, 4
      %v968 = vor.u32 %v967, %v963
      %v969 = vrot.slane %v968, 4
      %v971 = vshll.u32 %v866, 16
      %v973 = vrot.slane %v971, 5
      %v974 = vsel %vm266, %v969, %v973
      %v976 = vshrl.u32 %v839, 16
      %v978 = vrot.slane %v976, 4
      %v979 = vshll.u32 %v839, 16
      %v981 = vrot.slane %v979, 5
      %v982 = vor.u32 %v978, %v981
      %v983 = vrot.slane %v982, 4
      %v985 = vshll.u32 %v840, 16
      %v987 = vrot.slane %v985, 5
      %v988 = vsel %vm266, %v983, %v987
      %v989 = vshrl.u32 %v840, 16
      %v991 = vrot.slane %v989, 4
      %v992 = vor.u32 %v991, %v987
      %v993 = vrot.slane %v992, 4
      %v995 = vshll.u32 %v867, 16
      %v997 = vrot.slane %v995, 5
      %v998 = vsel %vm266, %v993, %v997
      %v1000 = vshrl.u32 %v841, 16
      %v1002 = vrot.slane %v1000, 4
      %v1003 = vshll.u32 %v841, 16
      %v1005 = vrot.slane %v1003, 5
      %v1006 = vor.u32 %v1002, %v1005
      %v1007 = vrot.slane %v1006, 4
      %v1009 = vshll.u32 %v842, 16
      %v1011 = vrot.slane %v1009, 5
      %v1012 = vsel %vm266, %v1007, %v1011
      %v1013 = vshrl.u32 %v842, 16
      %v1015 = vrot.slane %v1013, 4
      %v1016 = vor.u32 %v1015, %v1011
      %v1017 = vrot.slane %v1016, 4
      %v1019 = vshll.u32 %v868, 16
      %v1021 = vrot.slane %v1019, 5
      %v1022 = vsel %vm266, %v1017, %v1021
      %v1024 = vshrl.u32 %v843, 16
      %v1026 = vrot.slane %v1024, 4
      %v1027 = vshll.u32 %v843, 16
      %v1029 = vrot.slane %v1027, 5
      %v1030 = vor.u32 %v1026, %v1029
      %v1031 = vrot.slane %v1030, 4
      %v1033 = vshll.u32 %v844, 16
      %v1035 = vrot.slane %v1033, 5
      %v1036 = vsel %vm266, %v1031, %v1035
      %v1037 = vshrl.u32 %v844, 16
      %v1039 = vrot.slane %v1037, 4
      %v1040 = vor.u32 %v1039, %v1035
      %v1041 = vrot.slane %v1040, 4
      %v1043 = vshll.u32 %v869, 16
      %v1045 = vrot.slane %v1043, 5
      %v1046 = vsel %vm266, %v1041, %v1045
      %v1048 = vshrl.u32 %v845, 16
      %v1050 = vrot.slane %v1048, 4
      %v1051 = vshll.u32 %v845, 16
      %v1053 = vrot.slane %v1051, 5
      %v1054 = vor.u32 %v1050, %v1053
      %v1055 = vrot.slane %v1054, 4
      %v1057 = vshll.u32 %v846, 16
      %v1059 = vrot.slane %v1057, 5
      %v1060 = vsel %vm266, %v1055, %v1059
      %v1061 = vshrl.u32 %v846, 16
      %v1063 = vrot.slane %v1061, 4
      %v1064 = vor.u32 %v1063, %v1059
      %v1065 = vrot.slane %v1064, 4
      %v1067 = vshll.u32 %v870, 16
      %v1069 = vrot.slane %v1067, 5
      %v1070 = vsel %vm266, %v1065, %v1069
      %v1072 = vshrl.u32 %v847, 16
      %v1074 = vrot.slane %v1072, 4
      %v1075 = vshll.u32 %v847, 16
      %v1077 = vrot.slane %v1075, 5
      %v1078 = vor.u32 %v1074, %v1077
      %v1079 = vrot.slane %v1078, 4
      %v1081 = vshll.u32 %v848, 16
      %v1083 = vrot.slane %v1081, 5
      %v1084 = vsel %vm266, %v1079, %v1083
      %v1085 = vshrl.u32 %v848, 16
      %v1087 = vrot.slane %v1085, 4
      %v1088 = vor.u32 %v1087, %v1083
      %v1089 = vrot.slane %v1088, 4
      %v1091 = vshll.u32 %v871, 16
      %v1093 = vrot.slane %v1091, 5
      %v1094 = vsel %vm266, %v1089, %v1093
      %v1096 = vshrl.u32 %v849, 16
      %v1098 = vrot.slane %v1096, 4
      %v1099 = vshll.u32 %v849, 16
      %v1101 = vrot.slane %v1099, 5
      %v1102 = vor.u32 %v1098, %v1101
      %v1103 = vrot.slane %v1102, 4
      %v1105 = vshll.u32 %v850, 16
      %v1107 = vrot.slane %v1105, 5
      %v1108 = vsel %vm266, %v1103, %v1107
      %v1109 = vshrl.u32 %v850, 16
      %v1111 = vrot.slane %v1109, 4
      %v1112 = vor.u32 %v1111, %v1107
      %v1113 = vrot.slane %v1112, 4
      %v1115 = vshll.u32 %v872, 16
      %v1117 = vrot.slane %v1115, 5
      %v1118 = vsel %vm266, %v1113, %v1117
      %v1120 = vshrl.u32 %v851, 16
      %v1122 = vrot.slane %v1120, 4
      %v1123 = vshll.u32 %v851, 16
      %v1125 = vrot.slane %v1123, 5
      %v1126 = vor.u32 %v1122, %v1125
      %v1127 = vrot.slane %v1126, 4
      %v1129 = vshll.u32 %v852, 16
      %v1131 = vrot.slane %v1129, 5
      %v1132 = vsel %vm266, %v1127, %v1131
      %v1133 = vshrl.u32 %v852, 16
      %v1135 = vrot.slane %v1133, 4
      %v1136 = vor.u32 %v1135, %v1131
      %v1137 = vrot.slane %v1136, 4
      %v1139 = vshll.u32 %v873, 16
      %v1141 = vrot.slane %v1139, 5
      %v1142 = vsel %vm266, %v1137, %v1141
      %v1144 = vshrl.u32 %v853, 16
      %v1146 = vrot.slane %v1144, 4
      %v1147 = vshll.u32 %v853, 16
      %v1149 = vrot.slane %v1147, 5
      %v1150 = vor.u32 %v1146, %v1149
      %v1151 = vrot.slane %v1150, 4
      %v1153 = vshll.u32 %v854, 16
      %v1155 = vrot.slane %v1153, 5
      %v1156 = vsel %vm266, %v1151, %v1155
      %v1157 = vshrl.u32 %v854, 16
      %v1159 = vrot.slane %v1157, 4
      %v1160 = vor.u32 %v1159, %v1155
      %v1161 = vrot.slane %v1160, 4
      %v1163 = vshll.u32 %v874, 16
      %v1165 = vrot.slane %v1163, 5
      %v1166 = vsel %vm266, %v1161, %v1165
      %v1168 = vshrl.u32 %v855, 16
      %v1170 = vrot.slane %v1168, 4
      %v1171 = vshll.u32 %v855, 16
      %v1173 = vrot.slane %v1171, 5
      %v1174 = vor.u32 %v1170, %v1173
      %v1175 = vrot.slane %v1174, 4
      %v1177 = vshll.u32 %v856, 16
      %v1179 = vrot.slane %v1177, 5
      %v1180 = vsel %vm266, %v1175, %v1179
      %v1181 = vshrl.u32 %v856, 16
      %v1183 = vrot.slane %v1181, 4
      %v1184 = vor.u32 %v1183, %v1179
      %v1185 = vrot.slane %v1184, 4
      %v1187 = vshll.u32 %v875, 16
      %v1189 = vrot.slane %v1187, 5
      %v1190 = vsel %vm266, %v1185, %v1189
      %v1192 = vshrl.u32 %v857, 16
      %v1194 = vrot.slane %v1192, 4
      %v1195 = vshll.u32 %v857, 16
      %v1197 = vrot.slane %v1195, 5
      %v1198 = vor.u32 %v1194, %v1197
      %v1199 = vrot.slane %v1198, 4
      %v1201 = vshll.u32 %v858, 16
      %v1203 = vrot.slane %v1201, 5
      %v1204 = vsel %vm266, %v1199, %v1203
      %v1205 = vshrl.u32 %v858, 16
      %v1207 = vrot.slane %v1205, 4
      %v1208 = vor.u32 %v1207, %v1203
      %v1209 = vrot.slane %v1208, 4
      %v1211 = vshll.u32 %v876, 16
      %v1213 = vrot.slane %v1211, 5
      %v1214 = vsel %vm266, %v1209, %v1213
      %v1216 = vshrl.u32 %v859, 16
      %v1218 = vrot.slane %v1216, 4
      %v1219 = vshll.u32 %v859, 16
      %v1221 = vrot.slane %v1219, 5
      %v1222 = vor.u32 %v1218, %v1221
      %v1223 = vrot.slane %v1222, 4
      %v1225 = vshll.u32 %v860, 16
      %v1227 = vrot.slane %v1225, 5
      %v1228 = vsel %vm266, %v1223, %v1227
      %v1229 = vshrl.u32 %v860, 16
      %v1231 = vrot.slane %v1229, 4
      %v1232 = vor.u32 %v1231, %v1227
      %v1233 = vrot.slane %v1232, 4
      %v1235 = vshll.u32 %v877, 16
      %v1237 = vrot.slane %v1235, 5
      %v1238 = vsel %vm266, %v1233, %v1237
      %v1240 = vshrl.u32 %v861, 16
      %v1242 = vrot.slane %v1240, 4
      %v1243 = vshll.u32 %v861, 16
      %v1245 = vrot.slane %v1243, 5
      %v1246 = vor.u32 %v1242, %v1245
      %v1247 = vrot.slane %v1246, 4
      %v1249 = vshll.u32 %v862, 16
      %v1251 = vrot.slane %v1249, 5
      %v1252 = vsel %vm266, %v1247, %v1251
      %v1253 = vshrl.u32 %v862, 16
      %v1255 = vrot.slane %v1253, 4
      %v1256 = vor.u32 %v1255, %v1251
      %v1257 = vrot.slane %v1256, 4
      %v1259 = vshll.u32 %v878, 16
      %v1261 = vrot.slane %v1259, 5
      %v1262 = vsel %vm266, %v1257, %v1261
      %v1263 = vld [vmem:[%s830] sm:$0xe]
      %v1264 = vld [vmem:[%s830 + $0xc] sm:$0xe]
      %v1265 = vld [vmem:[%s830 + $0x18] sm:$0xe]
      %v1266 = vld [vmem:[%s830 + $0x24] sm:$0xe]
      %v1267 = vld [vmem:[%s830 + $0x30] sm:$0xe]
      %v1268 = vld [vmem:[%s830 + $0x3c] sm:$0xe]
      %v1269 = vld [vmem:[%s830 + $0x48] sm:$0xe]
      %v1270 = vld [vmem:[%s830 + $0x54] sm:$0xe]
      %v1271 = vld [vmem:[%s830 + $0x60] sm:$0xe]
      %v1272 = vld [vmem:[%s830 + $0x6c] sm:$0xe]
      %v1273 = vld [vmem:[%s830 + $0x78] sm:$0xe]
      %v1274 = vld [vmem:[%s830 + $0x84] sm:$0xe]
      %v1275 = vld [vmem:[%s830 + $0x90] sm:$0xe]
      %v1276 = vld [vmem:[%s830 + $0x9c] sm:$0xe]
      %v1277 = vld [vmem:[%s830 + $0xa8] sm:$0xe]
      %v1278 = vld [vmem:[%s830 + $0xb4] sm:$0xe]
      %v1327 = vrot.slane %v1263, 5
      %v1328 = vrot.slane %v1327, 4
      %v1329 = vrot.slane %v832, 5
      %v1330 = vsel %vm717, %v1328, %v1329
      %v1331 = vrot.slane %v1329, 4
      %v1332 = vrot.slane %v863, 5
      %v1333 = vsel %vm717, %v1331, %v1332
      %v1334 = vrot.slane %v1264, 5
      %v1335 = vrot.slane %v1334, 4
      %v1336 = vrot.slane %v834, 5
      %v1337 = vsel %vm717, %v1335, %v1336
      %v1338 = vrot.slane %v1336, 4
      %v1339 = vrot.slane %v864, 5
      %v1340 = vsel %vm717, %v1338, %v1339
      %v1341 = vrot.slane %v1265, 5
      %v1342 = vrot.slane %v1341, 4
      %v1343 = vrot.slane %v836, 5
      %v1344 = vsel %vm717, %v1342, %v1343
      %v1345 = vrot.slane %v1343, 4
      %v1346 = vrot.slane %v865, 5
      %v1347 = vsel %vm717, %v1345, %v1346
      %v1348 = vrot.slane %v1266, 5
      %v1349 = vrot.slane %v1348, 4
      %v1350 = vrot.slane %v838, 5
      %v1351 = vsel %vm717, %v1349, %v1350
      %v1352 = vrot.slane %v1350, 4
      %v1353 = vrot.slane %v866, 5
      %v1354 = vsel %vm717, %v1352, %v1353
      %v1355 = vrot.slane %v1267, 5
      %v1356 = vrot.slane %v1355, 4
      %v1357 = vrot.slane %v840, 5
      %v1358 = vsel %vm717, %v1356, %v1357
      %v1359 = vrot.slane %v1357, 4
      %v1360 = vrot.slane %v867, 5
      %v1361 = vsel %vm717, %v1359, %v1360
      %v1362 = vrot.slane %v1268, 5
      %v1363 = vrot.slane %v1362, 4
      %v1364 = vrot.slane %v842, 5
      %v1365 = vsel %vm717, %v1363, %v1364
      %v1366 = vrot.slane %v1364, 4
      %v1367 = vrot.slane %v868, 5
      %v1368 = vsel %vm717, %v1366, %v1367
      %v1369 = vrot.slane %v1269, 5
      %v1370 = vrot.slane %v1369, 4
      %v1371 = vrot.slane %v844, 5
      %v1372 = vsel %vm717, %v1370, %v1371
      %v1373 = vrot.slane %v1371, 4
      %v1374 = vrot.slane %v869, 5
      %v1375 = vsel %vm717, %v1373, %v1374
      %v1376 = vrot.slane %v1270, 5
      %v1377 = vrot.slane %v1376, 4
      %v1378 = vrot.slane %v846, 5
      %v1379 = vsel %vm717, %v1377, %v1378
      %v1380 = vrot.slane %v1378, 4
      %v1381 = vrot.slane %v870, 5
      %v1382 = vsel %vm717, %v1380, %v1381
      %v1383 = vrot.slane %v1271, 5
      %v1384 = vrot.slane %v1383, 4
      %v1385 = vrot.slane %v848, 5
      %v1386 = vsel %vm717, %v1384, %v1385
      %v1387 = vrot.slane %v1385, 4
      %v1388 = vrot.slane %v871, 5
      %v1389 = vsel %vm717, %v1387, %v1388
      %v1390 = vrot.slane %v1272, 5
      %v1391 = vrot.slane %v1390, 4
      %v1392 = vrot.slane %v850, 5
      %v1393 = vsel %vm717, %v1391, %v1392
      %v1394 = vrot.slane %v1392, 4
      %v1395 = vrot.slane %v872, 5
      %v1396 = vsel %vm717, %v1394, %v1395
      %v1397 = vrot.slane %v1273, 5
      %v1398 = vrot.slane %v1397, 4
      %v1399 = vrot.slane %v852, 5
      %v1400 = vsel %vm717, %v1398, %v1399
      %v1401 = vrot.slane %v1399, 4
      %v1402 = vrot.slane %v873, 5
      %v1403 = vsel %vm717, %v1401, %v1402
      %v1404 = vrot.slane %v1274, 5
      %v1405 = vrot.slane %v1404, 4
      %v1406 = vrot.slane %v854, 5
      %v1407 = vsel %vm717, %v1405, %v1406
      %v1408 = vrot.slane %v1406, 4
      %v1409 = vrot.slane %v874, 5
      %v1410 = vsel %vm717, %v1408, %v1409
      %v1411 = vrot.slane %v1275, 5
      %v1412 = vrot.slane %v1411, 4
      %v1413 = vrot.slane %v856, 5
      %v1414 = vsel %vm717, %v1412, %v1413
      %v1415 = vrot.slane %v1413, 4
      %v1416 = vrot.slane %v875, 5
      %v1417 = vsel %vm717, %v1415, %v1416
      %v1418 = vrot.slane %v1276, 5
      %v1419 = vrot.slane %v1418, 4
      %v1420 = vrot.slane %v858, 5
      %v1421 = vsel %vm717, %v1419, %v1420
      %v1422 = vrot.slane %v1420, 4
      %v1423 = vrot.slane %v876, 5
      %v1424 = vsel %vm717, %v1422, %v1423
      %v1425 = vrot.slane %v1277, 5
      %v1426 = vrot.slane %v1425, 4
      %v1427 = vrot.slane %v860, 5
      %v1428 = vsel %vm717, %v1426, %v1427
      %v1429 = vrot.slane %v1427, 4
      %v1430 = vrot.slane %v877, 5
      %v1431 = vsel %vm717, %v1429, %v1430
      %v1432 = vrot.slane %v1278, 5
      %v1433 = vrot.slane %v1432, 4
      %v1434 = vrot.slane %v862, 5
      %v1435 = vsel %vm717, %v1433, %v1434
      %v1436 = vrot.slane %v1434, 4
      %v1437 = vrot.slane %v878, 5
      %v1438 = vsel %vm717, %v1436, %v1437
      %s1439 = scalar_lea.vmem %s203, 24
      %v1440 = vld [vmem:[%s1439] sm:$0xf]
      %v1441 = vld [vmem:[%s1439 + $0x4] sm:$0xf]
      %v1442 = vld [vmem:[%s1439 + $0xc] sm:$0xf]
      %v1443 = vld [vmem:[%s1439 + $0x10] sm:$0xf]
      %v1444 = vld [vmem:[%s1439 + $0x18] sm:$0xf]
      %v1445 = vld [vmem:[%s1439 + $0x1c] sm:$0xf]
      %v1446 = vld [vmem:[%s1439 + $0x24] sm:$0xf]
      %v1447 = vld [vmem:[%s1439 + $0x28] sm:$0xf]
      %v1448 = vld [vmem:[%s1439 + $0x30] sm:$0xf]
      %v1449 = vld [vmem:[%s1439 + $0x34] sm:$0xf]
      %v1450 = vld [vmem:[%s1439 + $0x3c] sm:$0xf]
      %v1451 = vld [vmem:[%s1439 + $0x40] sm:$0xf]
      %v1452 = vld [vmem:[%s1439 + $0x48] sm:$0xf]
      %v1453 = vld [vmem:[%s1439 + $0x4c] sm:$0xf]
      %v1454 = vld [vmem:[%s1439 + $0x54] sm:$0xf]
      %v1455 = vld [vmem:[%s1439 + $0x58] sm:$0xf]
      %v1456 = vld [vmem:[%s1439 + $0x60] sm:$0xf]
      %v1457 = vld [vmem:[%s1439 + $0x64] sm:$0xf]
      %v1458 = vld [vmem:[%s1439 + $0x6c] sm:$0xf]
      %v1459 = vld [vmem:[%s1439 + $0x70] sm:$0xf]
      %v1460 = vld [vmem:[%s1439 + $0x78] sm:$0xf]
      %v1461 = vld [vmem:[%s1439 + $0x7c] sm:$0xf]
      %v1462 = vld [vmem:[%s1439 + $0x84] sm:$0xf]
      %v1463 = vld [vmem:[%s1439 + $0x88] sm:$0xf]
      %v1464 = vld [vmem:[%s1439 + $0x90] sm:$0xf]
      %v1465 = vld [vmem:[%s1439 + $0x94] sm:$0xf]
      %v1466 = vld [vmem:[%s1439 + $0x9c] sm:$0xf]
      %v1467 = vld [vmem:[%s1439 + $0xa0] sm:$0xf]
      %v1468 = vld [vmem:[%s1439 + $0xa8] sm:$0xf]
      %v1469 = vld [vmem:[%s1439 + $0xac] sm:$0xf]
      %v1470 = vld [vmem:[%s1439 + $0xb4] sm:$0xf]
      %v1471 = vld [vmem:[%s1439 + $0xb8] sm:$0xf]
      %v1472 = vld [vmem:[%s1439 + $0x8] sm:$0x1]
      %v1473 = vld [vmem:[%s1439 + $0x14] sm:$0x1]
      %v1474 = vld [vmem:[%s1439 + $0x20] sm:$0x1]
      %v1475 = vld [vmem:[%s1439 + $0x2c] sm:$0x1]
      %v1476 = vld [vmem:[%s1439 + $0x38] sm:$0x1]
      %v1477 = vld [vmem:[%s1439 + $0x44] sm:$0x1]
      %v1478 = vld [vmem:[%s1439 + $0x50] sm:$0x1]
      %v1479 = vld [vmem:[%s1439 + $0x5c] sm:$0x1]
      %v1480 = vld [vmem:[%s1439 + $0x68] sm:$0x1]
      %v1481 = vld [vmem:[%s1439 + $0x74] sm:$0x1]
      %v1482 = vld [vmem:[%s1439 + $0x80] sm:$0x1]
      %v1483 = vld [vmem:[%s1439 + $0x8c] sm:$0x1]
      %v1484 = vld [vmem:[%s1439 + $0x98] sm:$0x1]
      %v1485 = vld [vmem:[%s1439 + $0xa4] sm:$0x1]
      %v1486 = vld [vmem:[%s1439 + $0xb0] sm:$0x1]
      %v1487 = vld [vmem:[%s1439 + $0xbc] sm:$0x1]
      %v1489 = vshrl.u32 %v1440, 16
      %v1491 = vrot.slane %v1489, 4
      %v1492 = vshll.u32 %v1440, 16
      %v1494 = vrot.slane %v1492, 5
      %v1495 = vor.u32 %v1491, %v1494
      %v1496 = vrot.slane %v1495, 4
      %v1498 = vshll.u32 %v1441, 16
      %v1500 = vrot.slane %v1498, 5
      %v1501 = vsel %vm266, %v1496, %v1500
      %v1502 = vshrl.u32 %v1441, 16
      %v1504 = vrot.slane %v1502, 4
      %v1505 = vor.u32 %v1504, %v1500
      %v1506 = vrot.slane %v1505, 4
      %v1508 = vshll.u32 %v1472, 16
      %v1510 = vrot.slane %v1508, 5
      %v1511 = vsel %vm266, %v1506, %v1510
      %v1513 = vshrl.u32 %v1442, 16
      %v1515 = vrot.slane %v1513, 4
      %v1516 = vshll.u32 %v1442, 16
      %v1518 = vrot.slane %v1516, 5
      %v1519 = vor.u32 %v1515, %v1518
      %v1520 = vrot.slane %v1519, 4
      %v1522 = vshll.u32 %v1443, 16
      %v1524 = vrot.slane %v1522, 5
      %v1525 = vsel %vm266, %v1520, %v1524
      %v1526 = vshrl.u32 %v1443, 16
      %v1528 = vrot.slane %v1526, 4
      %v1529 = vor.u32 %v1528, %v1524
      %v1530 = vrot.slane %v1529, 4
      %v1532 = vshll.u32 %v1473, 16
      %v1534 = vrot.slane %v1532, 5
      %v1535 = vsel %vm266, %v1530, %v1534
      %v1537 = vshrl.u32 %v1444, 16
      %v1539 = vrot.slane %v1537, 4
      %v1540 = vshll.u32 %v1444, 16
      %v1542 = vrot.slane %v1540, 5
      %v1543 = vor.u32 %v1539, %v1542
      %v1544 = vrot.slane %v1543, 4
      %v1546 = vshll.u32 %v1445, 16
      %v1548 = vrot.slane %v1546, 5
      %v1549 = vsel %vm266, %v1544, %v1548
      %v1550 = vshrl.u32 %v1445, 16
      %v1552 = vrot.slane %v1550, 4
      %v1553 = vor.u32 %v1552, %v1548
      %v1554 = vrot.slane %v1553, 4
      %v1556 = vshll.u32 %v1474, 16
      %v1558 = vrot.slane %v1556, 5
      %v1559 = vsel %vm266, %v1554, %v1558
      %v1561 = vshrl.u32 %v1446, 16
      %v1563 = vrot.slane %v1561, 4
      %v1564 = vshll.u32 %v1446, 16
      %v1566 = vrot.slane %v1564, 5
      %v1567 = vor.u32 %v1563, %v1566
      %v1568 = vrot.slane %v1567, 4
      %v1570 = vshll.u32 %v1447, 16
      %v1572 = vrot.slane %v1570, 5
      %v1573 = vsel %vm266, %v1568, %v1572
      %v1574 = vshrl.u32 %v1447, 16
      %v1576 = vrot.slane %v1574, 4
      %v1577 = vor.u32 %v1576, %v1572
      %v1578 = vrot.slane %v1577, 4
      %v1580 = vshll.u32 %v1475, 16
      %v1582 = vrot.slane %v1580, 5
      %v1583 = vsel %vm266, %v1578, %v1582
      %v1585 = vshrl.u32 %v1448, 16
      %v1587 = vrot.slane %v1585, 4
      %v1588 = vshll.u32 %v1448, 16
      %v1590 = vrot.slane %v1588, 5
      %v1591 = vor.u32 %v1587, %v1590
      %v1592 = vrot.slane %v1591, 4
      %v1594 = vshll.u32 %v1449, 16
      %v1596 = vrot.slane %v1594, 5
      %v1597 = vsel %vm266, %v1592, %v1596
      %v1598 = vshrl.u32 %v1449, 16
      %v1600 = vrot.slane %v1598, 4
      %v1601 = vor.u32 %v1600, %v1596
      %v1602 = vrot.slane %v1601, 4
      %v1604 = vshll.u32 %v1476, 16
      %v1606 = vrot.slane %v1604, 5
      %v1607 = vsel %vm266, %v1602, %v1606
      %v1609 = vshrl.u32 %v1450, 16
      %v1611 = vrot.slane %v1609, 4
      %v1612 = vshll.u32 %v1450, 16
      %v1614 = vrot.slane %v1612, 5
      %v1615 = vor.u32 %v1611, %v1614
      %v1616 = vrot.slane %v1615, 4
      %v1618 = vshll.u32 %v1451, 16
      %v1620 = vrot.slane %v1618, 5
      %v1621 = vsel %vm266, %v1616, %v1620
      %v1622 = vshrl.u32 %v1451, 16
      %v1624 = vrot.slane %v1622, 4
      %v1625 = vor.u32 %v1624, %v1620
      %v1626 = vrot.slane %v1625, 4
      %v1628 = vshll.u32 %v1477, 16
      %v1630 = vrot.slane %v1628, 5
      %v1631 = vsel %vm266, %v1626, %v1630
      %v1633 = vshrl.u32 %v1452, 16
      %v1635 = vrot.slane %v1633, 4
      %v1636 = vshll.u32 %v1452, 16
      %v1638 = vrot.slane %v1636, 5
      %v1639 = vor.u32 %v1635, %v1638
      %v1640 = vrot.slane %v1639, 4
      %v1642 = vshll.u32 %v1453, 16
      %v1644 = vrot.slane %v1642, 5
      %v1645 = vsel %vm266, %v1640, %v1644
      %v1646 = vshrl.u32 %v1453, 16
      %v1648 = vrot.slane %v1646, 4
      %v1649 = vor.u32 %v1648, %v1644
      %v1650 = vrot.slane %v1649, 4
      %v1652 = vshll.u32 %v1478, 16
      %v1654 = vrot.slane %v1652, 5
      %v1655 = vsel %vm266, %v1650, %v1654
      %v1657 = vshrl.u32 %v1454, 16
      %v1659 = vrot.slane %v1657, 4
      %v1660 = vshll.u32 %v1454, 16
      %v1662 = vrot.slane %v1660, 5
      %v1663 = vor.u32 %v1659, %v1662
      %v1664 = vrot.slane %v1663, 4
      %v1666 = vshll.u32 %v1455, 16
      %v1668 = vrot.slane %v1666, 5
      %v1669 = vsel %vm266, %v1664, %v1668
      %v1670 = vshrl.u32 %v1455, 16
      %v1672 = vrot.slane %v1670, 4
      %v1673 = vor.u32 %v1672, %v1668
      %v1674 = vrot.slane %v1673, 4
      %v1676 = vshll.u32 %v1479, 16
      %v1678 = vrot.slane %v1676, 5
      %v1679 = vsel %vm266, %v1674, %v1678
      %v1681 = vshrl.u32 %v1456, 16
      %v1683 = vrot.slane %v1681, 4
      %v1684 = vshll.u32 %v1456, 16
      %v1686 = vrot.slane %v1684, 5
      %v1687 = vor.u32 %v1683, %v1686
      %v1688 = vrot.slane %v1687, 4
      %v1690 = vshll.u32 %v1457, 16
      %v1692 = vrot.slane %v1690, 5
      %v1693 = vsel %vm266, %v1688, %v1692
      %v1694 = vshrl.u32 %v1457, 16
      %v1696 = vrot.slane %v1694, 4
      %v1697 = vor.u32 %v1696, %v1692
      %v1698 = vrot.slane %v1697, 4
      %v1700 = vshll.u32 %v1480, 16
      %v1702 = vrot.slane %v1700, 5
      %v1703 = vsel %vm266, %v1698, %v1702
      %v1705 = vshrl.u32 %v1458, 16
      %v1707 = vrot.slane %v1705, 4
      %v1708 = vshll.u32 %v1458, 16
      %v1710 = vrot.slane %v1708, 5
      %v1711 = vor.u32 %v1707, %v1710
      %v1712 = vrot.slane %v1711, 4
      %v1714 = vshll.u32 %v1459, 16
      %v1716 = vrot.slane %v1714, 5
      %v1717 = vsel %vm266, %v1712, %v1716
      %v1718 = vshrl.u32 %v1459, 16
      %v1720 = vrot.slane %v1718, 4
      %v1721 = vor.u32 %v1720, %v1716
      %v1722 = vrot.slane %v1721, 4
      %v1724 = vshll.u32 %v1481, 16
      %v1726 = vrot.slane %v1724, 5
      %v1727 = vsel %vm266, %v1722, %v1726
      %v1729 = vshrl.u32 %v1460, 16
      %v1731 = vrot.slane %v1729, 4
      %v1732 = vshll.u32 %v1460, 16
      %v1734 = vrot.slane %v1732, 5
      %v1735 = vor.u32 %v1731, %v1734
      %v1736 = vrot.slane %v1735, 4
      %v1738 = vshll.u32 %v1461, 16
      %v1740 = vrot.slane %v1738, 5
      %v1741 = vsel %vm266, %v1736, %v1740
      %v1742 = vshrl.u32 %v1461, 16
      %v1744 = vrot.slane %v1742, 4
      %v1745 = vor.u32 %v1744, %v1740
      %v1746 = vrot.slane %v1745, 4
      %v1748 = vshll.u32 %v1482, 16
      %v1750 = vrot.slane %v1748, 5
      %v1751 = vsel %vm266, %v1746, %v1750
      %v1753 = vshrl.u32 %v1462, 16
      %v1755 = vrot.slane %v1753, 4
      %v1756 = vshll.u32 %v1462, 16
      %v1758 = vrot.slane %v1756, 5
      %v1759 = vor.u32 %v1755, %v1758
      %v1760 = vrot.slane %v1759, 4
      %v1762 = vshll.u32 %v1463, 16
      %v1764 = vrot.slane %v1762, 5
      %v1765 = vsel %vm266, %v1760, %v1764
      %v1766 = vshrl.u32 %v1463, 16
      %v1768 = vrot.slane %v1766, 4
      %v1769 = vor.u32 %v1768, %v1764
      %v1770 = vrot.slane %v1769, 4
      %v1772 = vshll.u32 %v1483, 16
      %v1774 = vrot.slane %v1772, 5
      %v1775 = vsel %vm266, %v1770, %v1774
      %v1777 = vshrl.u32 %v1464, 16
      %v1779 = vrot.slane %v1777, 4
      %v1780 = vshll.u32 %v1464, 16
      %v1782 = vrot.slane %v1780, 5
      %v1783 = vor.u32 %v1779, %v1782
      %v1784 = vrot.slane %v1783, 4
      %v1786 = vshll.u32 %v1465, 16
      %v1788 = vrot.slane %v1786, 5
      %v1789 = vsel %vm266, %v1784, %v1788
      %v1790 = vshrl.u32 %v1465, 16
      %v1792 = vrot.slane %v1790, 4
      %v1793 = vor.u32 %v1792, %v1788
      %v1794 = vrot.slane %v1793, 4
      %v1796 = vshll.u32 %v1484, 16
      %v1798 = vrot.slane %v1796, 5
      %v1799 = vsel %vm266, %v1794, %v1798
      %v1801 = vshrl.u32 %v1466, 16
      %v1803 = vrot.slane %v1801, 4
      %v1804 = vshll.u32 %v1466, 16
      %v1806 = vrot.slane %v1804, 5
      %v1807 = vor.u32 %v1803, %v1806
      %v1808 = vrot.slane %v1807, 4
      %v1810 = vshll.u32 %v1467, 16
      %v1812 = vrot.slane %v1810, 5
      %v1813 = vsel %vm266, %v1808, %v1812
      %v1814 = vshrl.u32 %v1467, 16
      %v1816 = vrot.slane %v1814, 4
      %v1817 = vor.u32 %v1816, %v1812
      %v1818 = vrot.slane %v1817, 4
      %v1820 = vshll.u32 %v1485, 16
      %v1822 = vrot.slane %v1820, 5
      %v1823 = vsel %vm266, %v1818, %v1822
      %v1825 = vshrl.u32 %v1468, 16
      %v1827 = vrot.slane %v1825, 4
      %v1828 = vshll.u32 %v1468, 16
      %v1830 = vrot.slane %v1828, 5
      %v1831 = vor.u32 %v1827, %v1830
      %v1832 = vrot.slane %v1831, 4
      %v1834 = vshll.u32 %v1469, 16
      %v1836 = vrot.slane %v1834, 5
      %v1837 = vsel %vm266, %v1832, %v1836
      %v1838 = vshrl.u32 %v1469, 16
      %v1840 = vrot.slane %v1838, 4
      %v1841 = vor.u32 %v1840, %v1836
      %v1842 = vrot.slane %v1841, 4
      %v1844 = vshll.u32 %v1486, 16
      %v1846 = vrot.slane %v1844, 5
      %v1847 = vsel %vm266, %v1842, %v1846
      %v1849 = vshrl.u32 %v1470, 16
      %v1851 = vrot.slane %v1849, 4
      %v1852 = vshll.u32 %v1470, 16
      %v1854 = vrot.slane %v1852, 5
      %v1855 = vor.u32 %v1851, %v1854
      %v1856 = vrot.slane %v1855, 4
      %v1858 = vshll.u32 %v1471, 16
      %v1860 = vrot.slane %v1858, 5
      %v1861 = vsel %vm266, %v1856, %v1860
      %v1862 = vshrl.u32 %v1471, 16
      %v1864 = vrot.slane %v1862, 4
      %v1865 = vor.u32 %v1864, %v1860
      %v1866 = vrot.slane %v1865, 4
      %v1868 = vshll.u32 %v1487, 16
      %v1870 = vrot.slane %v1868, 5
      %v1871 = vsel %vm266, %v1866, %v1870
      %v1872 = vld [vmem:[%s1439] sm:$0xe]
      %v1873 = vld [vmem:[%s1439 + $0xc] sm:$0xe]
      %v1874 = vld [vmem:[%s1439 + $0x18] sm:$0xe]
      %v1875 = vld [vmem:[%s1439 + $0x24] sm:$0xe]
      %v1876 = vld [vmem:[%s1439 + $0x30] sm:$0xe]
      %v1877 = vld [vmem:[%s1439 + $0x3c] sm:$0xe]
      %v1878 = vld [vmem:[%s1439 + $0x48] sm:$0xe]
      %v1879 = vld [vmem:[%s1439 + $0x54] sm:$0xe]
      %v1880 = vld [vmem:[%s1439 + $0x60] sm:$0xe]
      %v1881 = vld [vmem:[%s1439 + $0x6c] sm:$0xe]
      %v1882 = vld [vmem:[%s1439 + $0x78] sm:$0xe]
      %v1883 = vld [vmem:[%s1439 + $0x84] sm:$0xe]
      %v1884 = vld [vmem:[%s1439 + $0x90] sm:$0xe]
      %v1885 = vld [vmem:[%s1439 + $0x9c] sm:$0xe]
      %v1886 = vld [vmem:[%s1439 + $0xa8] sm:$0xe]
      %v1887 = vld [vmem:[%s1439 + $0xb4] sm:$0xe]
      %v1936 = vrot.slane %v1872, 5
      %v1937 = vrot.slane %v1936, 4
      %v1938 = vrot.slane %v1441, 5
      %v1939 = vsel %vm717, %v1937, %v1938
      %v1940 = vrot.slane %v1938, 4
      %v1941 = vrot.slane %v1472, 5
      %v1942 = vsel %vm717, %v1940, %v1941
      %v1943 = vrot.slane %v1873, 5
      %v1944 = vrot.slane %v1943, 4
      %v1945 = vrot.slane %v1443, 5
      %v1946 = vsel %vm717, %v1944, %v1945
      %v1947 = vrot.slane %v1945, 4
      %v1948 = vrot.slane %v1473, 5
      %v1949 = vsel %vm717, %v1947, %v1948
      %v1950 = vrot.slane %v1874, 5
      %v1951 = vrot.slane %v1950, 4
      %v1952 = vrot.slane %v1445, 5
      %v1953 = vsel %vm717, %v1951, %v1952
      %v1954 = vrot.slane %v1952, 4
      %v1955 = vrot.slane %v1474, 5
      %v1956 = vsel %vm717, %v1954, %v1955
      %v1957 = vrot.slane %v1875, 5
      %v1958 = vrot.slane %v1957, 4
      %v1959 = vrot.slane %v1447, 5
      %v1960 = vsel %vm717, %v1958, %v1959
      %v1961 = vrot.slane %v1959, 4
      %v1962 = vrot.slane %v1475, 5
      %v1963 = vsel %vm717, %v1961, %v1962
      %v1964 = vrot.slane %v1876, 5
      %v1965 = vrot.slane %v1964, 4
      %v1966 = vrot.slane %v1449, 5
      %v1967 = vsel %vm717, %v1965, %v1966
      %v1968 = vrot.slane %v1966, 4
      %v1969 = vrot.slane %v1476, 5
      %v1970 = vsel %vm717, %v1968, %v1969
      %v1971 = vrot.slane %v1877, 5
      %v1972 = vrot.slane %v1971, 4
      %v1973 = vrot.slane %v1451, 5
      %v1974 = vsel %vm717, %v1972, %v1973
      %v1975 = vrot.slane %v1973, 4
      %v1976 = vrot.slane %v1477, 5
      %v1977 = vsel %vm717, %v1975, %v1976
      %v1978 = vrot.slane %v1878, 5
      %v1979 = vrot.slane %v1978, 4
      %v1980 = vrot.slane %v1453, 5
      %v1981 = vsel %vm717, %v1979, %v1980
      %v1982 = vrot.slane %v1980, 4
      %v1983 = vrot.slane %v1478, 5
      %v1984 = vsel %vm717, %v1982, %v1983
      %v1985 = vrot.slane %v1879, 5
      %v1986 = vrot.slane %v1985, 4
      %v1987 = vrot.slane %v1455, 5
      %v1988 = vsel %vm717, %v1986, %v1987
      %v1989 = vrot.slane %v1987, 4
      %v1990 = vrot.slane %v1479, 5
      %v1991 = vsel %vm717, %v1989, %v1990
      %v1992 = vrot.slane %v1880, 5
      %v1993 = vrot.slane %v1992, 4
      %v1994 = vrot.slane %v1457, 5
      %v1995 = vsel %vm717, %v1993, %v1994
      %v1996 = vrot.slane %v1994, 4
      %v1997 = vrot.slane %v1480, 5
      %v1998 = vsel %vm717, %v1996, %v1997
      %v1999 = vrot.slane %v1881, 5
      %v2000 = vrot.slane %v1999, 4
      %v2001 = vrot.slane %v1459, 5
      %v2002 = vsel %vm717, %v2000, %v2001
      %v2003 = vrot.slane %v2001, 4
      %v2004 = vrot.slane %v1481, 5
      %v2005 = vsel %vm717, %v2003, %v2004
      %v2006 = vrot.slane %v1882, 5
      %v2007 = vrot.slane %v2006, 4
      %v2008 = vrot.slane %v1461, 5
      %v2009 = vsel %vm717, %v2007, %v2008
      %v2010 = vrot.slane %v2008, 4
      %v2011 = vrot.slane %v1482, 5
      %v2012 = vsel %vm717, %v2010, %v2011
      %v2013 = vrot.slane %v1883, 5
      %v2014 = vrot.slane %v2013, 4
      %v2015 = vrot.slane %v1463, 5
      %v2016 = vsel %vm717, %v2014, %v2015
      %v2017 = vrot.slane %v2015, 4
      %v2018 = vrot.slane %v1483, 5
      %v2019 = vsel %vm717, %v2017, %v2018
      %v2020 = vrot.slane %v1884, 5
      %v2021 = vrot.slane %v2020, 4
      %v2022 = vrot.slane %v1465, 5
      %v2023 = vsel %vm717, %v2021, %v2022
      %v2024 = vrot.slane %v2022, 4
      %v2025 = vrot.slane %v1484, 5
      %v2026 = vsel %vm717, %v2024, %v2025
      %v2027 = vrot.slane %v1885, 5
      %v2028 = vrot.slane %v2027, 4
      %v2029 = vrot.slane %v1467, 5
      %v2030 = vsel %vm717, %v2028, %v2029
      %v2031 = vrot.slane %v2029, 4
      %v2032 = vrot.slane %v1485, 5
      %v2033 = vsel %vm717, %v2031, %v2032
      %v2034 = vrot.slane %v1886, 5
      %v2035 = vrot.slane %v2034, 4
      %v2036 = vrot.slane %v1469, 5
      %v2037 = vsel %vm717, %v2035, %v2036
      %v2038 = vrot.slane %v2036, 4
      %v2039 = vrot.slane %v1486, 5
      %v2040 = vsel %vm717, %v2038, %v2039
      %v2041 = vrot.slane %v1887, 5
      %v2042 = vrot.slane %v2041, 4
      %v2043 = vrot.slane %v1471, 5
      %v2044 = vsel %vm717, %v2042, %v2043
      %v2045 = vrot.slane %v2043, 4
      %v2046 = vrot.slane %v1487, 5
      %v2047 = vsel %vm717, %v2045, %v2046
      %v2064 = vunpack.c.l.b16 %v216
      %v2065 = vunpack.c.l.b16 %v217
      %v2066 = vunpack.c.l.b16 %v218
      %v2067 = vunpack.c.l.b16 %v219
      %v2068 = vunpack.c.l.b16 %v220
      %v2069 = vunpack.c.l.b16 %v221
      %v2070 = vunpack.c.l.b16 %v222
      %v2071 = vunpack.c.l.b16 %v223
      %v2072 = vunpack.c.l.b16 %v224
      %v2073 = vunpack.c.l.b16 %v225
      %v2074 = vunpack.c.l.b16 %v226
      %v2075 = vunpack.c.l.b16 %v227
      %v2076 = vunpack.c.l.b16 %v228
      %v2077 = vunpack.c.l.b16 %v229
      %v2078 = vunpack.c.l.b16 %v230
      %v2079 = vunpack.c.l.b16 %v231
      %v2080 = vunpack.c.l.b16 %v232
      %v2081 = vunpack.c.l.b16 %v233
      %v2082 = vunpack.c.l.b16 %v234
      %v2083 = vunpack.c.l.b16 %v235
      %v2084 = vunpack.c.l.b16 %v236
      %v2085 = vunpack.c.l.b16 %v237
      %v2086 = vunpack.c.l.b16 %v238
      %v2087 = vunpack.c.l.b16 %v239
      %v2088 = vunpack.c.l.b16 %v240
      %v2089 = vunpack.c.l.b16 %v241
      %v2090 = vunpack.c.l.b16 %v242
      %v2091 = vunpack.c.l.b16 %v243
      %v2092 = vunpack.c.l.b16 %v244
      %v2093 = vunpack.c.l.b16 %v245
      %v2094 = vunpack.c.l.b16 %v246
      %v2095 = vunpack.c.l.b16 %v247
      %v2096 = vpack.c.b16 %v2065, %v2064
      %v2097 = vpack.c.b16 %v2067, %v2066
      %v2098 = vpack.c.b16 %v2069, %v2068
      %v2099 = vpack.c.b16 %v2071, %v2070
      %v2100 = vpack.c.b16 %v2073, %v2072
      %v2101 = vpack.c.b16 %v2075, %v2074
      %v2102 = vpack.c.b16 %v2077, %v2076
      %v2103 = vpack.c.b16 %v2079, %v2078
      %v2104 = vpack.c.b16 %v2081, %v2080
      %v2105 = vpack.c.b16 %v2083, %v2082
      %v2106 = vpack.c.b16 %v2085, %v2084
      %v2107 = vpack.c.b16 %v2087, %v2086
      %v2108 = vpack.c.b16 %v2089, %v2088
      %v2109 = vpack.c.b16 %v2091, %v2090
      %v2110 = vpack.c.b16 %v2093, %v2092
      %v2111 = vpack.c.b16 %v2095, %v2094
      %v2112 = vunpack.c.l.b16 %v280
      %v2113 = vunpack.c.l.b16 %v290
      %v2114 = vunpack.c.l.b16 %v304
      %v2115 = vunpack.c.l.b16 %v314
      %v2116 = vunpack.c.l.b16 %v328
      %v2117 = vunpack.c.l.b16 %v338
      %v2118 = vunpack.c.l.b16 %v352
      %v2119 = vunpack.c.l.b16 %v362
      %v2120 = vunpack.c.l.b16 %v376
      %v2121 = vunpack.c.l.b16 %v386
      %v2122 = vunpack.c.l.b16 %v400
      %v2123 = vunpack.c.l.b16 %v410
      %v2124 = vunpack.c.l.b16 %v424
      %v2125 = vunpack.c.l.b16 %v434
      %v2126 = vunpack.c.l.b16 %v448
      %v2127 = vunpack.c.l.b16 %v458
      %v2128 = vunpack.c.l.b16 %v472
      %v2129 = vunpack.c.l.b16 %v482
      %v2130 = vunpack.c.l.b16 %v496
      %v2131 = vunpack.c.l.b16 %v506
      %v2132 = vunpack.c.l.b16 %v520
      %v2133 = vunpack.c.l.b16 %v530
      %v2134 = vunpack.c.l.b16 %v544
      %v2135 = vunpack.c.l.b16 %v554
      %v2136 = vunpack.c.l.b16 %v568
      %v2137 = vunpack.c.l.b16 %v578
      %v2138 = vunpack.c.l.b16 %v592
      %v2139 = vunpack.c.l.b16 %v602
      %v2140 = vunpack.c.l.b16 %v616
      %v2141 = vunpack.c.l.b16 %v626
      %v2142 = vunpack.c.l.b16 %v640
      %v2143 = vunpack.c.l.b16 %v650
      %v2144 = vpack.c.b16 %v2113, %v2112
      %v2145 = vpack.c.b16 %v2115, %v2114
      %v2146 = vpack.c.b16 %v2117, %v2116
      %v2147 = vpack.c.b16 %v2119, %v2118
      %v2148 = vpack.c.b16 %v2121, %v2120
      %v2149 = vpack.c.b16 %v2123, %v2122
      %v2150 = vpack.c.b16 %v2125, %v2124
      %v2151 = vpack.c.b16 %v2127, %v2126
      %v2152 = vpack.c.b16 %v2129, %v2128
      %v2153 = vpack.c.b16 %v2131, %v2130
      %v2154 = vpack.c.b16 %v2133, %v2132
      %v2155 = vpack.c.b16 %v2135, %v2134
      %v2156 = vpack.c.b16 %v2137, %v2136
      %v2157 = vpack.c.b16 %v2139, %v2138
      %v2158 = vpack.c.b16 %v2141, %v2140
      %v2159 = vpack.c.b16 %v2143, %v2142
      %2160 = vrot.lane.b32.xlu0 %v2144, 4
      %v2161 = vpop.permute.xlu0 %2160
      %2162 = vrot.lane.b32.xlu0 %v2145, 4
      %v2163 = vpop.permute.xlu0 %2162
      %2164 = vrot.lane.b32.xlu0 %v2146, 4
      %v2165 = vpop.permute.xlu0 %2164
      %2166 = vrot.lane.b32.xlu0 %v2147, 4
      %v2167 = vpop.permute.xlu0 %2166
      %2168 = vrot.lane.b32.xlu0 %v2148, 4
      %v2169 = vpop.permute.xlu0 %2168
      %2170 = vrot.lane.b32.xlu0 %v2149, 4
      %v2171 = vpop.permute.xlu0 %2170
      %2172 = vrot.lane.b32.xlu0 %v2150, 4
      %v2173 = vpop.permute.xlu0 %2172
      %2174 = vrot.lane.b32.xlu0 %v2151, 4
      %v2175 = vpop.permute.xlu0 %2174
      %2176 = vrot.lane.b32.xlu0 %v2152, 4
      %v2177 = vpop.permute.xlu0 %2176
      %2178 = vrot.lane.b32.xlu0 %v2153, 4
      %v2179 = vpop.permute.xlu0 %2178
      %2180 = vrot.lane.b32.xlu0 %v2154, 4
      %v2181 = vpop.permute.xlu0 %2180
      %2182 = vrot.lane.b32.xlu0 %v2155, 4
      %v2183 = vpop.permute.xlu0 %2182
      %2184 = vrot.lane.b32.xlu0 %v2156, 4
      %v2185 = vpop.permute.xlu0 %2184
      %2186 = vrot.lane.b32.xlu0 %v2157, 4
      %v2187 = vpop.permute.xlu0 %2186
      %2188 = vrot.lane.b32.xlu0 %v2158, 4
      %v2189 = vpop.permute.xlu0 %2188
      %2190 = vrot.lane.b32.xlu0 %v2159, 4
      %v2191 = vpop.permute.xlu0 %2190
      %v2192 = vunpack.c.l.b16 %v721
      %v2193 = vunpack.c.l.b16 %v724
      %v2194 = vunpack.c.l.b16 %v728
      %v2195 = vunpack.c.l.b16 %v731
      %v2196 = vunpack.c.l.b16 %v735
      %v2197 = vunpack.c.l.b16 %v738
      %v2198 = vunpack.c.l.b16 %v742
      %v2199 = vunpack.c.l.b16 %v745
      %v2200 = vunpack.c.l.b16 %v749
      %v2201 = vunpack.c.l.b16 %v752
      %v2202 = vunpack.c.l.b16 %v756
      %v2203 = vunpack.c.l.b16 %v759
      %v2204 = vunpack.c.l.b16 %v763
      %v2205 = vunpack.c.l.b16 %v766
      %v2206 = vunpack.c.l.b16 %v770
      %v2207 = vunpack.c.l.b16 %v773
      %v2208 = vunpack.c.l.b16 %v777
      %v2209 = vunpack.c.l.b16 %v780
      %v2210 = vunpack.c.l.b16 %v784
      %v2211 = vunpack.c.l.b16 %v787
      %v2212 = vunpack.c.l.b16 %v791
      %v2213 = vunpack.c.l.b16 %v794
      %v2214 = vunpack.c.l.b16 %v798
      %v2215 = vunpack.c.l.b16 %v801
      %v2216 = vunpack.c.l.b16 %v805
      %v2217 = vunpack.c.l.b16 %v808
      %v2218 = vunpack.c.l.b16 %v812
      %v2219 = vunpack.c.l.b16 %v815
      %v2220 = vunpack.c.l.b16 %v819
      %v2221 = vunpack.c.l.b16 %v822
      %v2222 = vunpack.c.l.b16 %v826
      %v2223 = vunpack.c.l.b16 %v829
      %v2224 = vpack.c.b16 %v2193, %v2192
      %v2225 = vpack.c.b16 %v2195, %v2194
      %v2226 = vpack.c.b16 %v2197, %v2196
      %v2227 = vpack.c.b16 %v2199, %v2198
      %v2228 = vpack.c.b16 %v2201, %v2200
      %v2229 = vpack.c.b16 %v2203, %v2202
      %v2230 = vpack.c.b16 %v2205, %v2204
      %v2231 = vpack.c.b16 %v2207, %v2206
      %v2232 = vpack.c.b16 %v2209, %v2208
      %v2233 = vpack.c.b16 %v2211, %v2210
      %v2234 = vpack.c.b16 %v2213, %v2212
      %v2235 = vpack.c.b16 %v2215, %v2214
      %v2236 = vpack.c.b16 %v2217, %v2216
      %v2237 = vpack.c.b16 %v2219, %v2218
      %v2238 = vpack.c.b16 %v2221, %v2220
      %v2239 = vpack.c.b16 %v2223, %v2222
      %2240 = vrot.lane.b32.xlu0 %v2224, 8
      %v2241 = vpop.permute.xlu0 %2240
      %2242 = vrot.lane.b32.xlu0 %v2225, 8
      %v2243 = vpop.permute.xlu0 %2242
      %2244 = vrot.lane.b32.xlu0 %v2226, 8
      %v2245 = vpop.permute.xlu0 %2244
      %2246 = vrot.lane.b32.xlu0 %v2227, 8
      %v2247 = vpop.permute.xlu0 %2246
      %2248 = vrot.lane.b32.xlu0 %v2228, 8
      %v2249 = vpop.permute.xlu0 %2248
      %2250 = vrot.lane.b32.xlu0 %v2229, 8
      %v2251 = vpop.permute.xlu0 %2250
      %2252 = vrot.lane.b32.xlu0 %v2230, 8
      %v2253 = vpop.permute.xlu0 %2252
      %2254 = vrot.lane.b32.xlu0 %v2231, 8
      %v2255 = vpop.permute.xlu0 %2254
      %2256 = vrot.lane.b32.xlu0 %v2232, 8
      %v2257 = vpop.permute.xlu0 %2256
      %2258 = vrot.lane.b32.xlu0 %v2233, 8
      %v2259 = vpop.permute.xlu0 %2258
      %2260 = vrot.lane.b32.xlu0 %v2234, 8
      %v2261 = vpop.permute.xlu0 %2260
      %2262 = vrot.lane.b32.xlu0 %v2235, 8
      %v2263 = vpop.permute.xlu0 %2262
      %2264 = vrot.lane.b32.xlu0 %v2236, 8
      %v2265 = vpop.permute.xlu0 %2264
      %2266 = vrot.lane.b32.xlu0 %v2237, 8
      %v2267 = vpop.permute.xlu0 %2266
      %2268 = vrot.lane.b32.xlu0 %v2238, 8
      %v2269 = vpop.permute.xlu0 %2268
      %2270 = vrot.lane.b32.xlu0 %v2239, 8
      %v2271 = vpop.permute.xlu0 %2270
      %v2288 = vunpack.c.l.b16 %v831
      %v2289 = vunpack.c.l.b16 %v832
      %v2290 = vunpack.c.l.b16 %v833
      %v2291 = vunpack.c.l.b16 %v834
      %v2292 = vunpack.c.l.b16 %v835
      %v2293 = vunpack.c.l.b16 %v836
      %v2294 = vunpack.c.l.b16 %v837
      %v2295 = vunpack.c.l.b16 %v838
      %v2296 = vunpack.c.l.b16 %v839
      %v2297 = vunpack.c.l.b16 %v840
      %v2298 = vunpack.c.l.b16 %v841
      %v2299 = vunpack.c.l.b16 %v842
      %v2300 = vunpack.c.l.b16 %v843
      %v2301 = vunpack.c.l.b16 %v844
      %v2302 = vunpack.c.l.b16 %v845
      %v2303 = vunpack.c.l.b16 %v846
      %v2304 = vunpack.c.l.b16 %v847
      %v2305 = vunpack.c.l.b16 %v848
      %v2306 = vunpack.c.l.b16 %v849
      %v2307 = vunpack.c.l.b16 %v850
      %v2308 = vunpack.c.l.b16 %v851
      %v2309 = vunpack.c.l.b16 %v852
      %v2310 = vunpack.c.l.b16 %v853
      %v2311 = vunpack.c.l.b16 %v854
      %v2312 = vunpack.c.l.b16 %v855
      %v2313 = vunpack.c.l.b16 %v856
      %v2314 = vunpack.c.l.b16 %v857
      %v2315 = vunpack.c.l.b16 %v858
      %v2316 = vunpack.c.l.b16 %v859
      %v2317 = vunpack.c.l.b16 %v860
      %v2318 = vunpack.c.l.b16 %v861
      %v2319 = vunpack.c.l.b16 %v862
      %v2320 = vpack.c.b16 %v2289, %v2288
      %v2321 = vpack.c.b16 %v2291, %v2290
      %v2322 = vpack.c.b16 %v2293, %v2292
      %v2323 = vpack.c.b16 %v2295, %v2294
      %v2324 = vpack.c.b16 %v2297, %v2296
      %v2325 = vpack.c.b16 %v2299, %v2298
      %v2326 = vpack.c.b16 %v2301, %v2300
      %v2327 = vpack.c.b16 %v2303, %v2302
      %v2328 = vpack.c.b16 %v2305, %v2304
      %v2329 = vpack.c.b16 %v2307, %v2306
      %v2330 = vpack.c.b16 %v2309, %v2308
      %v2331 = vpack.c.b16 %v2311, %v2310
      %v2332 = vpack.c.b16 %v2313, %v2312
      %v2333 = vpack.c.b16 %v2315, %v2314
      %v2334 = vpack.c.b16 %v2317, %v2316
      %v2335 = vpack.c.b16 %v2319, %v2318
      %2336 = vrot.lane.b32.xlu0 %v2320, 12
      %v2337 = vpop.permute.xlu0 %2336
      %2338 = vrot.lane.b32.xlu0 %v2321, 12
      %v2339 = vpop.permute.xlu0 %2338
      %2340 = vrot.lane.b32.xlu0 %v2322, 12
      %v2341 = vpop.permute.xlu0 %2340
      %2342 = vrot.lane.b32.xlu0 %v2323, 12
      %v2343 = vpop.permute.xlu0 %2342
      %2344 = vrot.lane.b32.xlu0 %v2324, 12
      %v2345 = vpop.permute.xlu0 %2344
      %2346 = vrot.lane.b32.xlu0 %v2325, 12
      %v2347 = vpop.permute.xlu0 %2346
      %2348 = vrot.lane.b32.xlu0 %v2326, 12
      %v2349 = vpop.permute.xlu0 %2348
      %2350 = vrot.lane.b32.xlu0 %v2327, 12
      %v2351 = vpop.permute.xlu0 %2350
      %2352 = vrot.lane.b32.xlu0 %v2328, 12
      %v2353 = vpop.permute.xlu0 %2352
      %2354 = vrot.lane.b32.xlu0 %v2329, 12
      %v2355 = vpop.permute.xlu0 %2354
      %2356 = vrot.lane.b32.xlu0 %v2330, 12
      %v2357 = vpop.permute.xlu0 %2356
      %2358 = vrot.lane.b32.xlu0 %v2331, 12
      %v2359 = vpop.permute.xlu0 %2358
      %2360 = vrot.lane.b32.xlu0 %v2332, 12
      %v2361 = vpop.permute.xlu0 %2360
      %2362 = vrot.lane.b32.xlu0 %v2333, 12
      %v2363 = vpop.permute.xlu0 %2362
      %2364 = vrot.lane.b32.xlu0 %v2334, 12
      %v2365 = vpop.permute.xlu0 %2364
      %2366 = vrot.lane.b32.xlu0 %v2335, 12
      %v2367 = vpop.permute.xlu0 %2366
      %v2368 = vunpack.c.l.b16 %v892
      %v2369 = vunpack.c.l.b16 %v902
      %v2370 = vunpack.c.l.b16 %v916
      %v2371 = vunpack.c.l.b16 %v926
      %v2372 = vunpack.c.l.b16 %v940
      %v2373 = vunpack.c.l.b16 %v950
      %v2374 = vunpack.c.l.b16 %v964
      %v2375 = vunpack.c.l.b16 %v974
      %v2376 = vunpack.c.l.b16 %v988
      %v2377 = vunpack.c.l.b16 %v998
      %v2378 = vunpack.c.l.b16 %v1012
      %v2379 = vunpack.c.l.b16 %v1022
      %v2380 = vunpack.c.l.b16 %v1036
      %v2381 = vunpack.c.l.b16 %v1046
      %v2382 = vunpack.c.l.b16 %v1060
      %v2383 = vunpack.c.l.b16 %v1070
      %v2384 = vunpack.c.l.b16 %v1084
      %v2385 = vunpack.c.l.b16 %v1094
      %v2386 = vunpack.c.l.b16 %v1108
      %v2387 = vunpack.c.l.b16 %v1118
      %v2388 = vunpack.c.l.b16 %v1132
      %v2389 = vunpack.c.l.b16 %v1142
      %v2390 = vunpack.c.l.b16 %v1156
      %v2391 = vunpack.c.l.b16 %v1166
      %v2392 = vunpack.c.l.b16 %v1180
      %v2393 = vunpack.c.l.b16 %v1190
      %v2394 = vunpack.c.l.b16 %v1204
      %v2395 = vunpack.c.l.b16 %v1214
      %v2396 = vunpack.c.l.b16 %v1228
      %v2397 = vunpack.c.l.b16 %v1238
      %v2398 = vunpack.c.l.b16 %v1252
      %v2399 = vunpack.c.l.b16 %v1262
      %v2400 = vpack.c.b16 %v2369, %v2368
      %v2401 = vpack.c.b16 %v2371, %v2370
      %v2402 = vpack.c.b16 %v2373, %v2372
      %v2403 = vpack.c.b16 %v2375, %v2374
      %v2404 = vpack.c.b16 %v2377, %v2376
      %v2405 = vpack.c.b16 %v2379, %v2378
      %v2406 = vpack.c.b16 %v2381, %v2380
      %v2407 = vpack.c.b16 %v2383, %v2382
      %v2408 = vpack.c.b16 %v2385, %v2384
      %v2409 = vpack.c.b16 %v2387, %v2386
      %v2410 = vpack.c.b16 %v2389, %v2388
      %v2411 = vpack.c.b16 %v2391, %v2390
      %v2412 = vpack.c.b16 %v2393, %v2392
      %v2413 = vpack.c.b16 %v2395, %v2394
      %v2414 = vpack.c.b16 %v2397, %v2396
      %v2415 = vpack.c.b16 %v2399, %v2398
      %2416 = vrot.lane.b32.xlu0 %v2400, 16
      %v2417 = vpop.permute.xlu0 %2416
      %2418 = vrot.lane.b32.xlu0 %v2401, 16
      %v2419 = vpop.permute.xlu0 %2418
      %2420 = vrot.lane.b32.xlu0 %v2402, 16
      %v2421 = vpop.permute.xlu0 %2420
      %2422 = vrot.lane.b32.xlu0 %v2403, 16
      %v2423 = vpop.permute.xlu0 %2422
      %2424 = vrot.lane.b32.xlu0 %v2404, 16
      %v2425 = vpop.permute.xlu0 %2424
      %2426 = vrot.lane.b32.xlu0 %v2405, 16
      %v2427 = vpop.permute.xlu0 %2426
      %2428 = vrot.lane.b32.xlu0 %v2406, 16
      %v2429 = vpop.permute.xlu0 %2428
      %2430 = vrot.lane.b32.xlu0 %v2407, 16
      %v2431 = vpop.permute.xlu0 %2430
      %2432 = vrot.lane.b32.xlu0 %v2408, 16
      %v2433 = vpop.permute.xlu0 %2432
      %2434 = vrot.lane.b32.xlu0 %v2409, 16
      %v2435 = vpop.permute.xlu0 %2434
      %2436 = vrot.lane.b32.xlu0 %v2410, 16
      %v2437 = vpop.permute.xlu0 %2436
      %2438 = vrot.lane.b32.xlu0 %v2411, 16
      %v2439 = vpop.permute.xlu0 %2438
      %2440 = vrot.lane.b32.xlu0 %v2412, 16
      %v2441 = vpop.permute.xlu0 %2440
      %2442 = vrot.lane.b32.xlu0 %v2413, 16
      %v2443 = vpop.permute.xlu0 %2442
      %2444 = vrot.lane.b32.xlu0 %v2414, 16
      %v2445 = vpop.permute.xlu0 %2444
      %2446 = vrot.lane.b32.xlu0 %v2415, 16
      %v2447 = vpop.permute.xlu0 %2446
      %v2448 = vunpack.c.l.b16 %v1330
      %v2449 = vunpack.c.l.b16 %v1333
      %v2450 = vunpack.c.l.b16 %v1337
      %v2451 = vunpack.c.l.b16 %v1340
      %v2452 = vunpack.c.l.b16 %v1344
      %v2453 = vunpack.c.l.b16 %v1347
      %v2454 = vunpack.c.l.b16 %v1351
      %v2455 = vunpack.c.l.b16 %v1354
      %v2456 = vunpack.c.l.b16 %v1358
      %v2457 = vunpack.c.l.b16 %v1361
      %v2458 = vunpack.c.l.b16 %v1365
      %v2459 = vunpack.c.l.b16 %v1368
      %v2460 = vunpack.c.l.b16 %v1372
      %v2461 = vunpack.c.l.b16 %v1375
      %v2462 = vunpack.c.l.b16 %v1379
      %v2463 = vunpack.c.l.b16 %v1382
      %v2464 = vunpack.c.l.b16 %v1386
      %v2465 = vunpack.c.l.b16 %v1389
      %v2466 = vunpack.c.l.b16 %v1393
      %v2467 = vunpack.c.l.b16 %v1396
      %v2468 = vunpack.c.l.b16 %v1400
      %v2469 = vunpack.c.l.b16 %v1403
      %v2470 = vunpack.c.l.b16 %v1407
      %v2471 = vunpack.c.l.b16 %v1410
      %v2472 = vunpack.c.l.b16 %v1414
      %v2473 = vunpack.c.l.b16 %v1417
      %v2474 = vunpack.c.l.b16 %v1421
      %v2475 = vunpack.c.l.b16 %v1424
      %v2476 = vunpack.c.l.b16 %v1428
      %v2477 = vunpack.c.l.b16 %v1431
      %v2478 = vunpack.c.l.b16 %v1435
      %v2479 = vunpack.c.l.b16 %v1438
      %v2480 = vpack.c.b16 %v2449, %v2448
      %v2481 = vpack.c.b16 %v2451, %v2450
      %v2482 = vpack.c.b16 %v2453, %v2452
      %v2483 = vpack.c.b16 %v2455, %v2454
      %v2484 = vpack.c.b16 %v2457, %v2456
      %v2485 = vpack.c.b16 %v2459, %v2458
      %v2486 = vpack.c.b16 %v2461, %v2460
      %v2487 = vpack.c.b16 %v2463, %v2462
      %v2488 = vpack.c.b16 %v2465, %v2464
      %v2489 = vpack.c.b16 %v2467, %v2466
      %v2490 = vpack.c.b16 %v2469, %v2468
      %v2491 = vpack.c.b16 %v2471, %v2470
      %v2492 = vpack.c.b16 %v2473, %v2472
      %v2493 = vpack.c.b16 %v2475, %v2474
      %v2494 = vpack.c.b16 %v2477, %v2476
      %v2495 = vpack.c.b16 %v2479, %v2478
      %2496 = vrot.lane.b32.xlu0 %v2480, 20
      %v2497 = vpop.permute.xlu0 %2496
      %2498 = vrot.lane.b32.xlu0 %v2481, 20
      %v2499 = vpop.permute.xlu0 %2498
      %2500 = vrot.lane.b32.xlu0 %v2482, 20
      %v2501 = vpop.permute.xlu0 %2500
      %2502 = vrot.lane.b32.xlu0 %v2483, 20
      %v2503 = vpop.permute.xlu0 %2502
      %2504 = vrot.lane.b32.xlu0 %v2484, 20
      %v2505 = vpop.permute.xlu0 %2504
      %2506 = vrot.lane.b32.xlu0 %v2485, 20
      %v2507 = vpop.permute.xlu0 %2506
      %2508 = vrot.lane.b32.xlu0 %v2486, 20
      %v2509 = vpop.permute.xlu0 %2508
      %2510 = vrot.lane.b32.xlu0 %v2487, 20
      %v2511 = vpop.permute.xlu0 %2510
      %2512 = vrot.lane.b32.xlu0 %v2488, 20
      %v2513 = vpop.permute.xlu0 %2512
      %2514 = vrot.lane.b32.xlu0 %v2489, 20
      %v2515 = vpop.permute.xlu0 %2514
      %2516 = vrot.lane.b32.xlu0 %v2490, 20
      %v2517 = vpop.permute.xlu0 %2516
      %2518 = vrot.lane.b32.xlu0 %v2491, 20
      %v2519 = vpop.permute.xlu0 %2518
      %2520 = vrot.lane.b32.xlu0 %v2492, 20
      %v2521 = vpop.permute.xlu0 %2520
      %2522 = vrot.lane.b32.xlu0 %v2493, 20
      %v2523 = vpop.permute.xlu0 %2522
      %2524 = vrot.lane.b32.xlu0 %v2494, 20
      %v2525 = vpop.permute.xlu0 %2524
      %2526 = vrot.lane.b32.xlu0 %v2495, 20
      %v2527 = vpop.permute.xlu0 %2526
      %v2544 = vunpack.c.l.b16 %v1440
      %v2545 = vunpack.c.l.b16 %v1441
      %v2546 = vunpack.c.l.b16 %v1442
      %v2547 = vunpack.c.l.b16 %v1443
      %v2548 = vunpack.c.l.b16 %v1444
      %v2549 = vunpack.c.l.b16 %v1445
      %v2550 = vunpack.c.l.b16 %v1446
      %v2551 = vunpack.c.l.b16 %v1447
      %v2552 = vunpack.c.l.b16 %v1448
      %v2553 = vunpack.c.l.b16 %v1449
      %v2554 = vunpack.c.l.b16 %v1450
      %v2555 = vunpack.c.l.b16 %v1451
      %v2556 = vunpack.c.l.b16 %v1452
      %v2557 = vunpack.c.l.b16 %v1453
      %v2558 = vunpack.c.l.b16 %v1454
      %v2559 = vunpack.c.l.b16 %v1455
      %v2560 = vunpack.c.l.b16 %v1456
      %v2561 = vunpack.c.l.b16 %v1457
      %v2562 = vunpack.c.l.b16 %v1458
      %v2563 = vunpack.c.l.b16 %v1459
      %v2564 = vunpack.c.l.b16 %v1460
      %v2565 = vunpack.c.l.b16 %v1461
      %v2566 = vunpack.c.l.b16 %v1462
      %v2567 = vunpack.c.l.b16 %v1463
      %v2568 = vunpack.c.l.b16 %v1464
      %v2569 = vunpack.c.l.b16 %v1465
      %v2570 = vunpack.c.l.b16 %v1466
      %v2571 = vunpack.c.l.b16 %v1467
      %v2572 = vunpack.c.l.b16 %v1468
      %v2573 = vunpack.c.l.b16 %v1469
      %v2574 = vunpack.c.l.b16 %v1470
      %v2575 = vunpack.c.l.b16 %v1471
      %v2576 = vpack.c.b16 %v2545, %v2544
      %v2577 = vpack.c.b16 %v2547, %v2546
      %v2578 = vpack.c.b16 %v2549, %v2548
      %v2579 = vpack.c.b16 %v2551, %v2550
      %v2580 = vpack.c.b16 %v2553, %v2552
      %v2581 = vpack.c.b16 %v2555, %v2554
      %v2582 = vpack.c.b16 %v2557, %v2556
      %v2583 = vpack.c.b16 %v2559, %v2558
      %v2584 = vpack.c.b16 %v2561, %v2560
      %v2585 = vpack.c.b16 %v2563, %v2562
      %v2586 = vpack.c.b16 %v2565, %v2564
      %v2587 = vpack.c.b16 %v2567, %v2566
      %v2588 = vpack.c.b16 %v2569, %v2568
      %v2589 = vpack.c.b16 %v2571, %v2570
      %v2590 = vpack.c.b16 %v2573, %v2572
      %v2591 = vpack.c.b16 %v2575, %v2574
      %2592 = vrot.lane.b32.xlu0 %v2576, 24
      %v2593 = vpop.permute.xlu0 %2592
      %2594 = vrot.lane.b32.xlu0 %v2577, 24
      %v2595 = vpop.permute.xlu0 %2594
      %2596 = vrot.lane.b32.xlu0 %v2578, 24
      %v2597 = vpop.permute.xlu0 %2596
      %2598 = vrot.lane.b32.xlu0 %v2579, 24
      %v2599 = vpop.permute.xlu0 %2598
      %2600 = vrot.lane.b32.xlu0 %v2580, 24
      %v2601 = vpop.permute.xlu0 %2600
      %2602 = vrot.lane.b32.xlu0 %v2581, 24
      %v2603 = vpop.permute.xlu0 %2602
      %2604 = vrot.lane.b32.xlu0 %v2582, 24
      %v2605 = vpop.permute.xlu0 %2604
      %2606 = vrot.lane.b32.xlu0 %v2583, 24
      %v2607 = vpop.permute.xlu0 %2606
      %2608 = vrot.lane.b32.xlu0 %v2584, 24
      %v2609 = vpop.permute.xlu0 %2608
      %2610 = vrot.lane.b32.xlu0 %v2585, 24
      %v2611 = vpop.permute.xlu0 %2610
      %2612 = vrot.lane.b32.xlu0 %v2586, 24
      %v2613 = vpop.permute.xlu0 %2612
      %2614 = vrot.lane.b32.xlu0 %v2587, 24
      %v2615 = vpop.permute.xlu0 %2614
      %2616 = vrot.lane.b32.xlu0 %v2588, 24
      %v2617 = vpop.permute.xlu0 %2616
      %2618 = vrot.lane.b32.xlu0 %v2589, 24
      %v2619 = vpop.permute.xlu0 %2618
      %2620 = vrot.lane.b32.xlu0 %v2590, 24
      %v2621 = vpop.permute.xlu0 %2620
      %2622 = vrot.lane.b32.xlu0 %v2591, 24
      %v2623 = vpop.permute.xlu0 %2622
      %v2624 = vunpack.c.l.b16 %v1501
      %v2625 = vunpack.c.l.b16 %v1511
      %v2626 = vunpack.c.l.b16 %v1525
      %v2627 = vunpack.c.l.b16 %v1535
      %v2628 = vunpack.c.l.b16 %v1549
      %v2629 = vunpack.c.l.b16 %v1559
      %v2630 = vunpack.c.l.b16 %v1573
      %v2631 = vunpack.c.l.b16 %v1583
      %v2632 = vunpack.c.l.b16 %v1597
      %v2633 = vunpack.c.l.b16 %v1607
      %v2634 = vunpack.c.l.b16 %v1621
      %v2635 = vunpack.c.l.b16 %v1631
      %v2636 = vunpack.c.l.b16 %v1645
      %v2637 = vunpack.c.l.b16 %v1655
      %v2638 = vunpack.c.l.b16 %v1669
      %v2639 = vunpack.c.l.b16 %v1679
      %v2640 = vunpack.c.l.b16 %v1693
      %v2641 = vunpack.c.l.b16 %v1703
      %v2642 = vunpack.c.l.b16 %v1717
      %v2643 = vunpack.c.l.b16 %v1727
      %v2644 = vunpack.c.l.b16 %v1741
      %v2645 = vunpack.c.l.b16 %v1751
      %v2646 = vunpack.c.l.b16 %v1765
      %v2647 = vunpack.c.l.b16 %v1775
      %v2648 = vunpack.c.l.b16 %v1789
      %v2649 = vunpack.c.l.b16 %v1799
      %v2650 = vunpack.c.l.b16 %v1813
      %v2651 = vunpack.c.l.b16 %v1823
      %v2652 = vunpack.c.l.b16 %v1837
      %v2653 = vunpack.c.l.b16 %v1847
      %v2654 = vunpack.c.l.b16 %v1861
      %v2655 = vunpack.c.l.b16 %v1871
      %v2656 = vpack.c.b16 %v2625, %v2624
      %v2657 = vpack.c.b16 %v2627, %v2626
      %v2658 = vpack.c.b16 %v2629, %v2628
      %v2659 = vpack.c.b16 %v2631, %v2630
      %v2660 = vpack.c.b16 %v2633, %v2632
      %v2661 = vpack.c.b16 %v2635, %v2634
      %v2662 = vpack.c.b16 %v2637, %v2636
      %v2663 = vpack.c.b16 %v2639, %v2638
      %v2664 = vpack.c.b16 %v2641, %v2640
      %v2665 = vpack.c.b16 %v2643, %v2642
      %v2666 = vpack.c.b16 %v2645, %v2644
      %v2667 = vpack.c.b16 %v2647, %v2646
      %v2668 = vpack.c.b16 %v2649, %v2648
      %v2669 = vpack.c.b16 %v2651, %v2650
      %v2670 = vpack.c.b16 %v2653, %v2652
      %v2671 = vpack.c.b16 %v2655, %v2654
      %2672 = vrot.lane.b32.xlu0 %v2656, 28
      %v2673 = vpop.permute.xlu0 %2672
      %2674 = vrot.lane.b32.xlu0 %v2657, 28
      %v2675 = vpop.permute.xlu0 %2674
      %2676 = vrot.lane.b32.xlu0 %v2658, 28
      %v2677 = vpop.permute.xlu0 %2676
      %2678 = vrot.lane.b32.xlu0 %v2659, 28
      %v2679 = vpop.permute.xlu0 %2678
      %2680 = vrot.lane.b32.xlu0 %v2660, 28
      %v2681 = vpop.permute.xlu0 %2680
      %2682 = vrot.lane.b32.xlu0 %v2661, 28
      %v2683 = vpop.permute.xlu0 %2682
      %2684 = vrot.lane.b32.xlu0 %v2662, 28
      %v2685 = vpop.permute.xlu0 %2684
      %2686 = vrot.lane.b32.xlu0 %v2663, 28
      %v2687 = vpop.permute.xlu0 %2686
      %2688 = vrot.lane.b32.xlu0 %v2664, 28
      %v2689 = vpop.permute.xlu0 %2688
      %2690 = vrot.lane.b32.xlu0 %v2665, 28
      %v2691 = vpop.permute.xlu0 %2690
      %2692 = vrot.lane.b32.xlu0 %v2666, 28
      %v2693 = vpop.permute.xlu0 %2692
      %2694 = vrot.lane.b32.xlu0 %v2667, 28
      %v2695 = vpop.permute.xlu0 %2694
      %2696 = vrot.lane.b32.xlu0 %v2668, 28
      %v2697 = vpop.permute.xlu0 %2696
      %2698 = vrot.lane.b32.xlu0 %v2669, 28
      %v2699 = vpop.permute.xlu0 %2698
      %2700 = vrot.lane.b32.xlu0 %v2670, 28
      %v2701 = vpop.permute.xlu0 %2700
      %2702 = vrot.lane.b32.xlu0 %v2671, 28
      %v2703 = vpop.permute.xlu0 %2702
      %v2704 = vunpack.c.l.b16 %v1939
      %v2705 = vunpack.c.l.b16 %v1942
      %v2706 = vunpack.c.l.b16 %v1946
      %v2707 = vunpack.c.l.b16 %v1949
      %v2708 = vunpack.c.l.b16 %v1953
      %v2709 = vunpack.c.l.b16 %v1956
      %v2710 = vunpack.c.l.b16 %v1960
      %v2711 = vunpack.c.l.b16 %v1963
      %v2712 = vunpack.c.l.b16 %v1967
      %v2713 = vunpack.c.l.b16 %v1970
      %v2714 = vunpack.c.l.b16 %v1974
      %v2715 = vunpack.c.l.b16 %v1977
      %v2716 = vunpack.c.l.b16 %v1981
      %v2717 = vunpack.c.l.b16 %v1984
      %v2718 = vunpack.c.l.b16 %v1988
      %v2719 = vunpack.c.l.b16 %v1991
      %v2720 = vunpack.c.l.b16 %v1995
      %v2721 = vunpack.c.l.b16 %v1998
      %v2722 = vunpack.c.l.b16 %v2002
      %v2723 = vunpack.c.l.b16 %v2005
      %v2724 = vunpack.c.l.b16 %v2009
      %v2725 = vunpack.c.l.b16 %v2012
      %v2726 = vunpack.c.l.b16 %v2016
      %v2727 = vunpack.c.l.b16 %v2019
      %v2728 = vunpack.c.l.b16 %v2023
      %v2729 = vunpack.c.l.b16 %v2026
      %v2730 = vunpack.c.l.b16 %v2030
      %v2731 = vunpack.c.l.b16 %v2033
      %v2732 = vunpack.c.l.b16 %v2037
      %v2733 = vunpack.c.l.b16 %v2040
      %v2734 = vunpack.c.l.b16 %v2044
      %v2735 = vunpack.c.l.b16 %v2047
      %v2736 = vpack.c.b16 %v2705, %v2704
      %v2737 = vpack.c.b16 %v2707, %v2706
      %v2738 = vpack.c.b16 %v2709, %v2708
      %v2739 = vpack.c.b16 %v2711, %v2710
      %v2740 = vpack.c.b16 %v2713, %v2712
      %v2741 = vpack.c.b16 %v2715, %v2714
      %v2742 = vpack.c.b16 %v2717, %v2716
      %v2743 = vpack.c.b16 %v2719, %v2718
      %v2744 = vpack.c.b16 %v2721, %v2720
      %v2745 = vpack.c.b16 %v2723, %v2722
      %v2746 = vpack.c.b16 %v2725, %v2724
      %v2747 = vpack.c.b16 %v2727, %v2726
      %v2748 = vpack.c.b16 %v2729, %v2728
      %v2749 = vpack.c.b16 %v2731, %v2730
      %v2750 = vpack.c.b16 %v2733, %v2732
      %v2751 = vpack.c.b16 %v2735, %v2734
      %2752 = vrot.lane.b32.xlu0 %v2736, 32
      %v2753 = vpop.permute.xlu0 %2752
      %2754 = vrot.lane.b32.xlu0 %v2737, 32
      %v2755 = vpop.permute.xlu0 %2754
      %2756 = vrot.lane.b32.xlu0 %v2738, 32
      %v2757 = vpop.permute.xlu0 %2756
      %2758 = vrot.lane.b32.xlu0 %v2739, 32
      %v2759 = vpop.permute.xlu0 %2758
      %2760 = vrot.lane.b32.xlu0 %v2740, 32
      %v2761 = vpop.permute.xlu0 %2760
      %2762 = vrot.lane.b32.xlu0 %v2741, 32
      %v2763 = vpop.permute.xlu0 %2762
      %2764 = vrot.lane.b32.xlu0 %v2742, 32
      %v2765 = vpop.permute.xlu0 %2764
      %2766 = vrot.lane.b32.xlu0 %v2743, 32
      %v2767 = vpop.permute.xlu0 %2766
      %2768 = vrot.lane.b32.xlu0 %v2744, 32
      %v2769 = vpop.permute.xlu0 %2768
      %2770 = vrot.lane.b32.xlu0 %v2745, 32
      %v2771 = vpop.permute.xlu0 %2770
      %2772 = vrot.lane.b32.xlu0 %v2746, 32
      %v2773 = vpop.permute.xlu0 %2772
      %2774 = vrot.lane.b32.xlu0 %v2747, 32
      %v2775 = vpop.permute.xlu0 %2774
      %2776 = vrot.lane.b32.xlu0 %v2748, 32
      %v2777 = vpop.permute.xlu0 %2776
      %2778 = vrot.lane.b32.xlu0 %v2749, 32
      %v2779 = vpop.permute.xlu0 %2778
      %2780 = vrot.lane.b32.xlu0 %v2750, 32
      %v2781 = vpop.permute.xlu0 %2780
      %2782 = vrot.lane.b32.xlu0 %v2751, 32
      %v2783 = vpop.permute.xlu0 %2782
      %vm2784 = vcmask 31744
      %v2787 = vsel %vm2784, %v2096, %v2161
      %v2790 = vsel %vm2784, %v2097, %v2163
      %v2793 = vsel %vm2784, %v2098, %v2165
      %v2796 = vsel %vm2784, %v2099, %v2167
      %v2799 = vsel %vm2784, %v2100, %v2169
      %v2802 = vsel %vm2784, %v2101, %v2171
      %v2805 = vsel %vm2784, %v2102, %v2173
      %v2808 = vsel %vm2784, %v2103, %v2175
      %v2811 = vsel %vm2784, %v2104, %v2177
      %v2814 = vsel %vm2784, %v2105, %v2179
      %v2817 = vsel %vm2784, %v2106, %v2181
      %v2820 = vsel %vm2784, %v2107, %v2183
      %v2823 = vsel %vm2784, %v2108, %v2185
      %v2826 = vsel %vm2784, %v2109, %v2187
      %v2829 = vsel %vm2784, %v2110, %v2189
      %v2832 = vsel %vm2784, %v2111, %v2191
      %vm2833 = vcmask 64512
      %v2835 = vsel %vm2833, %v2787, %v2241
      %v2837 = vsel %vm2833, %v2790, %v2243
      %v2839 = vsel %vm2833, %v2793, %v2245
      %v2841 = vsel %vm2833, %v2796, %v2247
      %v2843 = vsel %vm2833, %v2799, %v2249
      %v2845 = vsel %vm2833, %v2802, %v2251
      %v2847 = vsel %vm2833, %v2805, %v2253
      %v2849 = vsel %vm2833, %v2808, %v2255
      %v2851 = vsel %vm2833, %v2811, %v2257
      %v2853 = vsel %vm2833, %v2814, %v2259
      %v2855 = vsel %vm2833, %v2817, %v2261
      %v2857 = vsel %vm2833, %v2820, %v2263
      %v2859 = vsel %vm2833, %v2823, %v2265
      %v2861 = vsel %vm2833, %v2826, %v2267
      %v2863 = vsel %vm2833, %v2829, %v2269
      %v2865 = vsel %vm2833, %v2832, %v2271
      %vm2866 = vcmask 97280
      %v2868 = vsel %vm2866, %v2835, %v2337
      %v2870 = vsel %vm2866, %v2837, %v2339
      %v2872 = vsel %vm2866, %v2839, %v2341
      %v2874 = vsel %vm2866, %v2841, %v2343
      %v2876 = vsel %vm2866, %v2843, %v2345
      %v2878 = vsel %vm2866, %v2845, %v2347
      %v2880 = vsel %vm2866, %v2847, %v2349
      %v2882 = vsel %vm2866, %v2849, %v2351
      %v2884 = vsel %vm2866, %v2851, %v2353
      %v2886 = vsel %vm2866, %v2853, %v2355
      %v2888 = vsel %vm2866, %v2855, %v2357
      %v2890 = vsel %vm2866, %v2857, %v2359
      %v2892 = vsel %vm2866, %v2859, %v2361
      %v2894 = vsel %vm2866, %v2861, %v2363
      %v2896 = vsel %vm2866, %v2863, %v2365
      %v2898 = vsel %vm2866, %v2865, %v2367
      %vm2899 = vcmask 130048
      %v2901 = vsel %vm2899, %v2868, %v2417
      %v2903 = vsel %vm2899, %v2870, %v2419
      %v2905 = vsel %vm2899, %v2872, %v2421
      %v2907 = vsel %vm2899, %v2874, %v2423
      %v2909 = vsel %vm2899, %v2876, %v2425
      %v2911 = vsel %vm2899, %v2878, %v2427
      %v2913 = vsel %vm2899, %v2880, %v2429
      %v2915 = vsel %vm2899, %v2882, %v2431
      %v2917 = vsel %vm2899, %v2884, %v2433
      %v2919 = vsel %vm2899, %v2886, %v2435
      %v2921 = vsel %vm2899, %v2888, %v2437
      %v2923 = vsel %vm2899, %v2890, %v2439
      %v2925 = vsel %vm2899, %v2892, %v2441
      %v2927 = vsel %vm2899, %v2894, %v2443
      %v2929 = vsel %vm2899, %v2896, %v2445
      %v2931 = vsel %vm2899, %v2898, %v2447
      %vm2932 = vcmask 162816
      %v2934 = vsel %vm2932, %v2901, %v2497
      %v2936 = vsel %vm2932, %v2903, %v2499
      %v2938 = vsel %vm2932, %v2905, %v2501
      %v2940 = vsel %vm2932, %v2907, %v2503
      %v2942 = vsel %vm2932, %v2909, %v2505
      %v2944 = vsel %vm2932, %v2911, %v2507
      %v2946 = vsel %vm2932, %v2913, %v2509
      %v2948 = vsel %vm2932, %v2915, %v2511
      %v2950 = vsel %vm2932, %v2917, %v2513
      %v2952 = vsel %vm2932, %v2919, %v2515
      %v2954 = vsel %vm2932, %v2921, %v2517
      %v2956 = vsel %vm2932, %v2923, %v2519
      %v2958 = vsel %vm2932, %v2925, %v2521
      %v2960 = vsel %vm2932, %v2927, %v2523
      %v2962 = vsel %vm2932, %v2929, %v2525
      %v2964 = vsel %vm2932, %v2931, %v2527
      %vm2965 = vcmask 195584
      %v2967 = vsel %vm2965, %v2934, %v2593
      %v2969 = vsel %vm2965, %v2936, %v2595
      %v2971 = vsel %vm2965, %v2938, %v2597
      %v2973 = vsel %vm2965, %v2940, %v2599
      %v2975 = vsel %vm2965, %v2942, %v2601
      %v2977 = vsel %vm2965, %v2944, %v2603
      %v2979 = vsel %vm2965, %v2946, %v2605
      %v2981 = vsel %vm2965, %v2948, %v2607
      %v2983 = vsel %vm2965, %v2950, %v2609
      %v2985 = vsel %vm2965, %v2952, %v2611
      %v2987 = vsel %vm2965, %v2954, %v2613
      %v2989 = vsel %vm2965, %v2956, %v2615
      %v2991 = vsel %vm2965, %v2958, %v2617
      %v2993 = vsel %vm2965, %v2960, %v2619
      %v2995 = vsel %vm2965, %v2962, %v2621
      %v2997 = vsel %vm2965, %v2964, %v2623
      %vm2998 = vcmask 228352
      %v3000 = vsel %vm2998, %v2967, %v2673
      %v3002 = vsel %vm2998, %v2969, %v2675
      %v3004 = vsel %vm2998, %v2971, %v2677
      %v3006 = vsel %vm2998, %v2973, %v2679
      %v3008 = vsel %vm2998, %v2975, %v2681
      %v3010 = vsel %vm2998, %v2977, %v2683
      %v3012 = vsel %vm2998, %v2979, %v2685
      %v3014 = vsel %vm2998, %v2981, %v2687
      %v3016 = vsel %vm2998, %v2983, %v2689
      %v3018 = vsel %vm2998, %v2985, %v2691
      %v3020 = vsel %vm2998, %v2987, %v2693
      %v3022 = vsel %vm2998, %v2989, %v2695
      %v3024 = vsel %vm2998, %v2991, %v2697
      %v3026 = vsel %vm2998, %v2993, %v2699
      %v3028 = vsel %vm2998, %v2995, %v2701
      %v3030 = vsel %vm2998, %v2997, %v2703
      %vm3031 = vcmask 261120
      %v3033 = vsel %vm3031, %v3000, %v2753
      %v3035 = vsel %vm3031, %v3002, %v2755
      %v3037 = vsel %vm3031, %v3004, %v2757
      %v3039 = vsel %vm3031, %v3006, %v2759
      %v3041 = vsel %vm3031, %v3008, %v2761
      %v3043 = vsel %vm3031, %v3010, %v2763
      %v3045 = vsel %vm3031, %v3012, %v2765
      %v3047 = vsel %vm3031, %v3014, %v2767
      %v3049 = vsel %vm3031, %v3016, %v2769
      %v3051 = vsel %vm3031, %v3018, %v2771
      %v3053 = vsel %vm3031, %v3020, %v2773
      %v3055 = vsel %vm3031, %v3022, %v2775
      %v3057 = vsel %vm3031, %v3024, %v2777
      %v3059 = vsel %vm3031, %v3026, %v2779
      %v3061 = vsel %vm3031, %v3028, %v2781
      %v3063 = vsel %vm3031, %v3030, %v2783
      %v3064 = vld [vmem:[%s1] sm:$0xf]
      %v3065 = vld [vmem:[%s1 + $0x4] sm:$0xf]
      %v3066 = vld [vmem:[%s1 + $0x8] sm:$0xf]
      %v3067 = vld [vmem:[%s1 + $0xc] sm:$0xf]
      %v3068 = vld [vmem:[%s1 + $0x10] sm:$0x3]
      %v3074 = vunpack.c.l.b16 %v3064
      %v3075 = vunpack.c.l.b16 %v3065
      %v3076 = vunpack.c.l.b16 %v3066
      %v3077 = vunpack.c.l.b16 %v3067
      %v3078 = vunpack.c.l.b16 %v3068
      %v3079 = vpack.c.b16 %v3075, %v3074
      %v3080 = vpack.c.b16 %v3077, %v3076
      %v3081 = vpack.c.b16 %v3078, %v3078
      %vm3084 = vcmask 293888
      %v3085 = vsel %vm3084, %v3033, 0
      %v3087 = vsel %vm3084, %v3035, 0
      %v3089 = vsel %vm3084, %v3037, 0
      %v3091 = vsel %vm3084, %v3039, 0
      %v3093 = vsel %vm3084, %v3041, 0
      %v3095 = vsel %vm3084, %v3043, 0
      %v3097 = vsel %vm3084, %v3045, 0
      %v3099 = vsel %vm3084, %v3047, 0
      %v3101 = vsel %vm3084, %v3049, 0
      %v3103 = vsel %vm3084, %v3051, 0
      %v3105 = vsel %vm3084, %v3053, 0
      %v3107 = vsel %vm3084, %v3055, 0
      %v3109 = vsel %vm3084, %v3057, 0
      %v3111 = vsel %vm3084, %v3059, 0
      %v3113 = vsel %vm3084, %v3061, 0
      %v3115 = vsel %vm3084, %v3063, 0
      %vm3117 = vcmask 1041408
      %v3119 = vsel %vm3117, %v3081, 0
      %3121 = vmatprep.subr.bf16.mxu0 0
      %3122 = vmatpush1.bf16.msra.mxu0 %v3079
      %3123 = vmatprep.subr.bf16.mxu0 0
      %3124 = vmatpush1.bf16.msra.mxu0 %v3080
      %3125 = vmatprep.subr.bf16.mxu0 0
      %3126 = vmatpush1.bf16.msra.mxu0 %v3119
      %3127 = vmatprep.subr.bf16.mxu0 0
      %3128 = vmatpush1.bf16.msra.mxu0 0
      %3129 = vmatprep.subr.bf16.mxu0 0
      %3130 = vmatpush1.bf16.msra.mxu0 0
      %3131 = vmatprep.subr.bf16.mxu0 0
      %3132 = vmatpush1.bf16.msra.mxu0 0
      %3133 = vmatprep.subr.bf16.mxu0 0
      %3134 = vmatpush1.bf16.msra.mxu0 0
      %3135 = vmatprep.subr.bf16.mxu0 0
      %3136 = vmatpush1.bf16.msra.mxu0 0
      %3137 = vmatprep.subr.bf16.mxu0 0
      %3138 = vmatpush1.bf16.msra.mxu0 0
      %3139 = vmatprep.subr.bf16.mxu0 0
      %3140 = vmatpush1.bf16.msra.mxu0 0
      %3141 = vmatprep.subr.bf16.mxu0 0
      %3142 = vmatpush1.bf16.msra.mxu0 0
      %3143 = vmatprep.subr.bf16.mxu0 0
      %3144 = vmatpush1.bf16.msra.mxu0 0
      %3145 = vmatprep.subr.bf16.mxu0 0
      %3146 = vmatpush1.bf16.msra.mxu0 0
      %3147 = vmatprep.subr.bf16.mxu0 0
      %3148 = vmatpush1.bf16.msra.mxu0 0
      %3149 = vmatprep.subr.bf16.mxu0 0
      %3150 = vmatpush1.bf16.msra.mxu0 0
      %3151 = vmatprep.subr.bf16.mxu0 0
      %3152 = vmatpush1.bf16.msra.mxu0 0
      %3153 = vmatprep.mubr.bf16.mxu0 0
      %3154 = vmatmul.mubr.bf16.gmra.mrb[0].mxu0 %v3085
      %v3155 = vpop.f32.mrb[0].mxu0
      %v3156 = vadd.f32 0.0, %v3155
      %v3157 = vpop.f32.mrb[0].mxu0
      %v3158 = vpop.f32.mrb[0].mxu0
      %v3159 = vadd.f32 0.0, %v3158
      %v3160 = vpop.f32.mrb[0].mxu0
      %3161 = vmatprep.mubr.bf16.mxu0 0
      %3162 = vmatmul.mubr.bf16.gmra.mrb[0].mxu0 %v3087
      %v3163 = vpop.f32.mrb[0].mxu0
      %v3164 = vadd.f32 0.0, %v3163
      %v3165 = vpop.f32.mrb[0].mxu0
      %v3166 = vpop.f32.mrb[0].mxu0
      %v3167 = vadd.f32 0.0, %v3166
      %v3168 = vpop.f32.mrb[0].mxu0
      %3169 = vmatprep.mubr.bf16.mxu0 0
      %3170 = vmatmul.mubr.bf16.gmra.mrb[0].mxu0 %v3089
      %v3171 = vpop.f32.mrb[0].mxu0
      %v3172 = vadd.f32 0.0, %v3171
      %v3173 = vpop.f32.mrb[0].mxu0
      %v3174 = vpop.f32.mrb[0].mxu0
      %v3175 = vadd.f32 0.0, %v3174
      %v3176 = vpop.f32.mrb[0].mxu0
      %3177 = vmatprep.mubr.bf16.mxu0 0
      %3178 = vmatmul.mubr.bf16.gmra.mrb[0].mxu0 %v3091
      %v3179 = vpop.f32.mrb[0].mxu0
      %v3180 = vadd.f32 0.0, %v3179
      %v3181 = vpop.f32.mrb[0].mxu0
      %v3182 = vpop.f32.mrb[0].mxu0
      %v3183 = vadd.f32 0.0, %v3182
      %v3184 = vpop.f32.mrb[0].mxu0
      %3185 = vmatprep.mubr.bf16.mxu0 0
      %3186 = vmatmul.mubr.bf16.gmra.mrb[0].mxu0 %v3093
      %v3187 = vpop.f32.mrb[0].mxu0
      %v3188 = vadd.f32 0.0, %v3187
      %v3189 = vpop.f32.mrb[0].mxu0
      %v3190 = vpop.f32.mrb[0].mxu0
      %v3191 = vadd.f32 0.0, %v3190
      %v3192 = vpop.f32.mrb[0].mxu0
      %3193 = vmatprep.mubr.bf16.mxu0 0
      %3194 = vmatmul.mubr.bf16.gmra.mrb[0].mxu0 %v3095
      %v3195 = vpop.f32.mrb[0].mxu0
      %v3196 = vadd.f32 0.0, %v3195
      %v3197 = vpop.f32.mrb[0].mxu0
      %v3198 = vpop.f32.mrb[0].mxu0
      %v3199 = vadd.f32 0.0, %v3198
      %v3200 = vpop.f32.mrb[0].mxu0
      %3201 = vmatprep.mubr.bf16.mxu0 0
      %3202 = vmatmul.mubr.bf16.gmra.mrb[0].mxu0 %v3097
      %v3203 = vpop.f32.mrb[0].mxu0
      %v3204 = vadd.f32 0.0, %v3203
      %v3205 = vpop.f32.mrb[0].mxu0
      %v3206 = vpop.f32.mrb[0].mxu0
      %v3207 = vadd.f32 0.0, %v3206
      %v3208 = vpop.f32.mrb[0].mxu0
      %3209 = vmatprep.mubr.bf16.mxu0 0
      %3210 = vmatmul.mubr.bf16.gmra.mrb[0].mxu0 %v3099
      %v3211 = vpop.f32.mrb[0].mxu0
      %v3212 = vadd.f32 0.0, %v3211
      %v3213 = vpop.f32.mrb[0].mxu0
      %v3214 = vpop.f32.mrb[0].mxu0
      %v3215 = vadd.f32 0.0, %v3214
      %v3216 = vpop.f32.mrb[0].mxu0
      %3217 = vmatprep.mubr.bf16.mxu0 0
      %3218 = vmatmul.mubr.bf16.gmra.mrb[0].mxu0 %v3101
      %v3219 = vpop.f32.mrb[0].mxu0
      %v3220 = vadd.f32 0.0, %v3219
      %v3221 = vpop.f32.mrb[0].mxu0
      %v3222 = vpop.f32.mrb[0].mxu0
      %v3223 = vadd.f32 0.0, %v3222
      %v3224 = vpop.f32.mrb[0].mxu0
      %3225 = vmatprep.mubr.bf16.mxu0 0
      %3226 = vmatmul.mubr.bf16.gmra.mrb[0].mxu0 %v3103
      %v3227 = vpop.f32.mrb[0].mxu0
      %v3228 = vadd.f32 0.0, %v3227
      %v3229 = vpop.f32.mrb[0].mxu0
      %v3230 = vpop.f32.mrb[0].mxu0
      %v3231 = vadd.f32 0.0, %v3230
      %v3232 = vpop.f32.mrb[0].mxu0
      %3233 = vmatprep.mubr.bf16.mxu0 0
      %3234 = vmatmul.mubr.bf16.gmra.mrb[0].mxu0 %v3105
      %v3235 = vpop.f32.mrb[0].mxu0
      %v3236 = vadd.f32 0.0, %v3235
      %v3237 = vpop.f32.mrb[0].mxu0
      %v3238 = vpop.f32.mrb[0].mxu0
      %v3239 = vadd.f32 0.0, %v3238
      %v3240 = vpop.f32.mrb[0].mxu0
      %3241 = vmatprep.mubr.bf16.mxu0 0
      %3242 = vmatmul.mubr.bf16.gmra.mrb[0].mxu0 %v3107
      %v3243 = vpop.f32.mrb[0].mxu0
      %v3244 = vadd.f32 0.0, %v3243
      %v3245 = vpop.f32.mrb[0].mxu0
      %v3246 = vpop.f32.mrb[0].mxu0
      %v3247 = vadd.f32 0.0, %v3246
      %v3248 = vpop.f32.mrb[0].mxu0
      %3249 = vmatprep.mubr.bf16.mxu0 0
      %3250 = vmatmul.mubr.bf16.gmra.mrb[0].mxu0 %v3109
      %v3251 = vpop.f32.mrb[0].mxu0
      %v3252 = vadd.f32 0.0, %v3251
      %v3253 = vpop.f32.mrb[0].mxu0
      %v3254 = vpop.f32.mrb[0].mxu0
      %v3255 = vadd.f32 0.0, %v3254
      %v3256 = vpop.f32.mrb[0].mxu0
      %3257 = vmatprep.mubr.bf16.mxu0 0
      %3258 = vmatmul.mubr.bf16.gmra.mrb[0].mxu0 %v3111
      %v3259 = vpop.f32.mrb[0].mxu0
      %v3260 = vadd.f32 0.0, %v3259
      %v3261 = vpop.f32.mrb[0].mxu0
      %v3262 = vpop.f32.mrb[0].mxu0
      %v3263 = vadd.f32 0.0, %v3262
      %v3264 = vpop.f32.mrb[0].mxu0
      %3265 = vmatprep.mubr.bf16.mxu0 0
      %3266 = vmatmul.mubr.bf16.gmra.mrb[0].mxu0 %v3113
      %v3267 = vpop.f32.mrb[0].mxu0
      %v3268 = vadd.f32 0.0, %v3267
      %v3269 = vpop.f32.mrb[0].mxu0
      %v3270 = vpop.f32.mrb[0].mxu0
      %v3271 = vadd.f32 0.0, %v3270
      %v3272 = vpop.f32.mrb[0].mxu0
      %3273 = vmatprep.mubr.bf16.mxu0 0
      %3274 = vmatmul.mubr.bf16.gmra.mrb[0].mxu0 %v3115
      %v3275 = vpop.f32.mrb[0].mxu0
      %v3276 = vadd.f32 0.0, %v3275
      %v3277 = vpop.f32.mrb[0].mxu0
      %v3278 = vpop.f32.mrb[0].mxu0
      %v3279 = vadd.f32 0.0, %v3278
      %v3280 = vpop.f32.mrb[0].mxu0
      %3281 = vdwg.mxu0
      %v3282 = vadd.f32 %v3156, %v3159
      %v3283 = vadd.f32 %v3282, %v3164
      %v3284 = vadd.f32 %v3283, %v3167
      %v3285 = vadd.f32 %v3284, %v3172
      %v3286 = vadd.f32 %v3285, %v3175
      %v3287 = vadd.f32 %v3286, %v3180
      %v3288 = vadd.f32 %v3287, %v3183
      %v3289 = vadd.f32 %v3288, %v3188
      %v3290 = vadd.f32 %v3289, %v3191
      %v3291 = vadd.f32 %v3290, %v3196
      %v3292 = vadd.f32 %v3291, %v3199
      %v3293 = vadd.f32 %v3292, %v3204
      %v3294 = vadd.f32 %v3293, %v3207
      %v3295 = vadd.f32 %v3294, %v3212
      %v3296 = vadd.f32 %v3295, %v3215
      %v3297 = vadd.f32 %v3296, %v3220
      %v3298 = vadd.f32 %v3297, %v3223
      %v3299 = vadd.f32 %v3298, %v3228
      %v3300 = vadd.f32 %v3299, %v3231
      %v3301 = vadd.f32 %v3300, %v3236
      %v3302 = vadd.f32 %v3301, %v3239
      %v3303 = vadd.f32 %v3302, %v3244
      %v3304 = vadd.f32 %v3303, %v3247
      %v3305 = vadd.f32 %v3304, %v3252
      %v3306 = vadd.f32 %v3305, %v3255
      %v3307 = vadd.f32 %v3306, %v3260
      %v3308 = vadd.f32 %v3307, %v3263
      %v3309 = vadd.f32 %v3308, %v3268
      %v3310 = vadd.f32 %v3309, %v3271
      %v3311 = vadd.f32 %v3310, %v3276
      %v3312 = vadd.f32 %v3311, %v3279
      %v3313 = vrot.slane %v3312, 4
      %v3314 = vadd.f32 %v3312, %v3313
      %v3315 = vrot.slane %v3314, 2
      %v3316 = vadd.f32 %v3314, %v3315
      %v3317 = vrot.slane %v3316, 1
      %v3318 = vadd.f32 %v3316, %v3317
      %3319 = vst [vmem:[%s211] sm:$0x1] %v3318
      %v3320 = vmul.f32 %v3156, %v3156
      %v3321 = vmul.f32 %v3159, %v3159
      %v3322 = vmul.f32 %v3164, %v3164
      %v3323 = vmul.f32 %v3167, %v3167
      %v3324 = vmul.f32 %v3172, %v3172
      %v3325 = vmul.f32 %v3175, %v3175
      %v3326 = vmul.f32 %v3180, %v3180
      %v3327 = vmul.f32 %v3183, %v3183
      %v3328 = vmul.f32 %v3188, %v3188
      %v3329 = vmul.f32 %v3191, %v3191
      %v3330 = vmul.f32 %v3196, %v3196
      %v3331 = vmul.f32 %v3199, %v3199
      %v3332 = vmul.f32 %v3204, %v3204
      %v3333 = vmul.f32 %v3207, %v3207
      %v3334 = vmul.f32 %v3212, %v3212
      %v3335 = vmul.f32 %v3215, %v3215
      %v3336 = vmul.f32 %v3220, %v3220
      %v3337 = vmul.f32 %v3223, %v3223
      %v3338 = vmul.f32 %v3228, %v3228
      %v3339 = vmul.f32 %v3231, %v3231
      %v3340 = vmul.f32 %v3236, %v3236
      %v3341 = vmul.f32 %v3239, %v3239
      %v3342 = vmul.f32 %v3244, %v3244
      %v3343 = vmul.f32 %v3247, %v3247
      %v3344 = vmul.f32 %v3252, %v3252
      %v3345 = vmul.f32 %v3255, %v3255
      %v3346 = vmul.f32 %v3260, %v3260
      %v3347 = vmul.f32 %v3263, %v3263
      %v3348 = vmul.f32 %v3268, %v3268
      %v3349 = vmul.f32 %v3271, %v3271
      %v3350 = vmul.f32 %v3276, %v3276
      %v3351 = vmul.f32 %v3279, %v3279
      %v3352 = vadd.f32 %v3320, %v3321
      %v3353 = vadd.f32 %v3352, %v3322
      %v3354 = vadd.f32 %v3353, %v3323
      %v3355 = vadd.f32 %v3354, %v3324
      %v3356 = vadd.f32 %v3355, %v3325
      %v3357 = vadd.f32 %v3356, %v3326
      %v3358 = vadd.f32 %v3357, %v3327
      %v3359 = vadd.f32 %v3358, %v3328
      %v3360 = vadd.f32 %v3359, %v3329
      %v3361 = vadd.f32 %v3360, %v3330
      %v3362 = vadd.f32 %v3361, %v3331
      %v3363 = vadd.f32 %v3362, %v3332
      %v3364 = vadd.f32 %v3363, %v3333
      %v3365 = vadd.f32 %v3364, %v3334
      %v3366 = vadd.f32 %v3365, %v3335
      %v3367 = vadd.f32 %v3366, %v3336
      %v3368 = vadd.f32 %v3367, %v3337
      %v3369 = vadd.f32 %v3368, %v3338
      %v3370 = vadd.f32 %v3369, %v3339
      %v3371 = vadd.f32 %v3370, %v3340
      %v3372 = vadd.f32 %v3371, %v3341
      %v3373 = vadd.f32 %v3372, %v3342
      %v3374 = vadd.f32 %v3373, %v3343
      %v3375 = vadd.f32 %v3374, %v3344
      %v3376 = vadd.f32 %v3375, %v3345
      %v3377 = vadd.f32 %v3376, %v3346
      %v3378 = vadd.f32 %v3377, %v3347
      %v3379 = vadd.f32 %v3378, %v3348
      %v3380 = vadd.f32 %v3379, %v3349
      %v3381 = vadd.f32 %v3380, %v3350
      %v3382 = vadd.f32 %v3381, %v3351
      %v3383 = vrot.slane %v3382, 4
      %v3384 = vadd.f32 %v3382, %v3383
      %v3385 = vrot.slane %v3384, 2
      %v3386 = vadd.f32 %v3384, %v3385
      %v3387 = vrot.slane %v3386, 1
      %v3388 = vadd.f32 %v3386, %v3387
      %3389 = vst [vmem:[%s214] sm:$0x1] %v3388
      %3390 = vxpose.xlu0.b32.start [1/16] %v3156, 128
      %3391 = vxpose.xlu0.b32.cont [2/16] %v3159, 128
      %3392 = vxpose.xlu0.b32.cont [3/16] %v3164, 128
      %3393 = vxpose.xlu0.b32.cont [4/16] %v3167, 128
      %3394 = vxpose.xlu0.b32.cont [5/16] %v3172, 128
      %3395 = vxpose.xlu0.b32.cont [6/16] %v3175, 128
      %3396 = vxpose.xlu0.b32.cont [7/16] %v3180, 128
      %3397 = vxpose.xlu0.b32.cont [8/16] %v3183, 128
      %3398 = vxpose.xlu0.b32.cont [9/16] %v3188, 128
      %3399 = vxpose.xlu0.b32.cont [10/16] %v3191, 128
      %3400 = vxpose.xlu0.b32.cont [11/16] %v3196, 128
      %3401 = vxpose.xlu0.b32.cont [12/16] %v3199, 128
      %3402 = vxpose.xlu0.b32.cont [13/16] %v3204, 128
      %3403 = vxpose.xlu0.b32.cont [14/16] %v3207, 128
      %3404 = vxpose.xlu0.b32.cont [15/16] %v3212, 128
      %3405 = vxpose.xlu0.b32.end [16/16] %v3215, 128
      %v3406 = vpop.trf.xlu0
      %v3407 = vpop.trf.xlu0
      %v3408 = vpop.trf.xlu0
      %v3409 = vpop.trf.xlu0
      %v3410 = vpop.trf.xlu0
      %v3411 = vpop.trf.xlu0
      %v3412 = vpop.trf.xlu0
      %v3413 = vpop.trf.xlu0
      %v3414 = vpop.trf.xlu0
      %v3415 = vpop.trf.xlu0
      %v3416 = vpop.trf.xlu0
      %v3417 = vpop.trf.xlu0
      %v3418 = vpop.trf.xlu0
      %v3419 = vpop.trf.xlu0
      %v3420 = vpop.trf.xlu0
      %v3421 = vpop.trf.xlu0
      %3422 = vxpose.xlu0.b32.start [1/16] %v3220, 128
      %3423 = vxpose.xlu0.b32.cont [2/16] %v3223, 128
      %3424 = vxpose.xlu0.b32.cont [3/16] %v3228, 128
      %3425 = vxpose.xlu0.b32.cont [4/16] %v3231, 128
      %3426 = vxpose.xlu0.b32.cont [5/16] %v3236, 128
      %3427 = vxpose.xlu0.b32.cont [6/16] %v3239, 128
      %3428 = vxpose.xlu0.b32.cont [7/16] %v3244, 128
      %3429 = vxpose.xlu0.b32.cont [8/16] %v3247, 128
      %3430 = vxpose.xlu0.b32.cont [9/16] %v3252, 128
      %3431 = vxpose.xlu0.b32.cont [10/16] %v3255, 128
      %3432 = vxpose.xlu0.b32.cont [11/16] %v3260, 128
      %3433 = vxpose.xlu0.b32.cont [12/16] %v3263, 128
      %3434 = vxpose.xlu0.b32.cont [13/16] %v3268, 128
      %3435 = vxpose.xlu0.b32.cont [14/16] %v3271, 128
      %3436 = vxpose.xlu0.b32.cont [15/16] %v3276, 128
      %3437 = vxpose.xlu0.b32.end [16/16] %v3279, 128
      %v3438 = vpop.trf.xlu0
      %v3439 = vpop.trf.xlu0
      %v3440 = vpop.trf.xlu0
      %v3441 = vpop.trf.xlu0
      %v3442 = vpop.trf.xlu0
      %v3443 = vpop.trf.xlu0
      %v3444 = vpop.trf.xlu0
      %v3445 = vpop.trf.xlu0
      %v3446 = vpop.trf.xlu0
      %v3447 = vpop.trf.xlu0
      %v3448 = vpop.trf.xlu0
      %v3449 = vpop.trf.xlu0
      %v3450 = vpop.trf.xlu0
      %v3451 = vpop.trf.xlu0
      %v3452 = vpop.trf.xlu0
      %v3453 = vpop.trf.xlu0
      %3454 = vst [vmem:[%s208] sm:$0xff] %v3406
      %3455 = vst [vmem:[%s208 + $0x8] sm:$0xff] %v3438
      %p3456 = scmp.lt.s32.totalorder %s16, 1
      %s3457 = scalar_select %p3456, %s16, 1
      %s3458 = smul.addr %s3457, 2
      %s3459 = smul.addr %s3458, 8
      %s3460 = scalar_lea.vmem %s2, %s3459
      %p3461 = scmp.lt.s32.totalorder %s16, 1
      %s3462 = scalar_select %p3461, %s16, 1
      %s3463 = scalar_lea.vmem %s3, %s3462
      %p3464 = scmp.lt.s32.totalorder %s16, 1
      %s3465 = scalar_select %p3464, %s16, 1
      %s3466 = scalar_lea.vmem %s4, %s3465
      // Predicated region
      $region29: #{conv_bn_relu_forward.2} parent=27 // pred_check
        %p3467 = pneg %p81
      $region30: #{conv_bn_relu_forward.2} parent=27 // pred_check_branch
        %3469 = sbr.rel (%p3467) target = $region32
      $region31: #{conv_bn_relu_forward.2} parent=27 // pred_region
        _
      $region32: #{conv_bn_relu_forward.2} parent=27 // pred_fallthru
        _
      // Predicated region
      $region33: #{conv_bn_relu_forward.2} parent=27 // pred_check
        %p3470 = pneg %p107
      $region34: #{conv_bn_relu_forward.2} parent=27 // pred_check_branch
        %3472 = sbr.rel (%p3470) target = $region36
      $region35: #{conv_bn_relu_forward.2} parent=27 // pred_region
        _
      $region36: #{conv_bn_relu_forward.2} parent=27 // pred_fallthru
        _
      // Predicated region
      $region37: #{conv_bn_relu_forward.2} parent=27 // pred_check
        %p3473 = pneg %p133
      $region38: #{conv_bn_relu_forward.2} parent=27 // pred_check_branch
        %3475 = sbr.rel (%p3473) target = $region40
      $region39: #{conv_bn_relu_forward.2} parent=27 // pred_region
        _
      $region40: #{conv_bn_relu_forward.2} parent=27 // pred_fallthru
        _
    $region28: #{conv_bn_relu_forward.2} parent=5 // pred_fallthru
      _
    %p3476 = scmp.le.s32.totalorder 2, %s11
    // Predicated region
    $region41: #{conv_bn_relu_forward.2} parent=5 // pred_check
      %p3477 = pneg %p3476
    $region42: #{conv_bn_relu_forward.2} parent=5 // pred_check_branch
      %3479 = sbr.rel (%p3477) target = $region44
    $region43: #{conv_bn_relu_forward.2} parent=5 // pred_region
      %s3480 = ssub.s32 %s11, 2
      // Predicated region
      $region45: #{conv_bn_relu_forward.2} parent=43 // pred_check
        %p3481 = pneg %p87
      $region46: #{conv_bn_relu_forward.2} parent=43 // pred_check_branch
        %3483 = sbr.rel (%p3481) target = $region48
      $region47: #{conv_bn_relu_forward.2} parent=43 // pred_region
        %p3484 = scmp.lt.s32.totalorder %s17, 1
        %s3485 = scalar_select %p3484, %s17, 1
        %s3486 = smul.addr %s3485, 2
        %s3487 = smul.addr %s3486, 8
        %s3488 = scalar_lea.vmem %s2, %s3487
      $region48: #{conv_bn_relu_forward.2} parent=43 // pred_fallthru
        _
      // Predicated region
      $region49: #{conv_bn_relu_forward.2} parent=43 // pred_check
        %p3489 = pneg %p113
      $region50: #{conv_bn_relu_forward.2} parent=43 // pred_check_branch
        %3491 = sbr.rel (%p3489) target = $region52
      $region51: #{conv_bn_relu_forward.2} parent=43 // pred_region
        %p3492 = scmp.lt.s32.totalorder %s17, 1
        %s3493 = scalar_select %p3492, %s17, 1
        %s3494 = scalar_lea.vmem %s3, %s3493
      $region52: #{conv_bn_relu_forward.2} parent=43 // pred_fallthru
        _
      // Predicated region
      $region53: #{conv_bn_relu_forward.2} parent=43 // pred_check
        %p3495 = pneg %p139
      $region54: #{conv_bn_relu_forward.2} parent=43 // pred_check_branch
        %3497 = sbr.rel (%p3495) target = $region56
      $region55: #{conv_bn_relu_forward.2} parent=43 // pred_region
        %p3498 = scmp.lt.s32.totalorder %s17, 1
        %s3499 = scalar_select %p3498, %s17, 1
        %s3500 = scalar_lea.vmem %s4, %s3499
      $region56: #{conv_bn_relu_forward.2} parent=43 // pred_fallthru
        _
    $region44: #{conv_bn_relu_forward.2} parent=5 // pred_fallthru
      _
  $region6: #{conv_bn_relu_forward.2} parent=0 // loop_footer
    %s15 = sadd.s32 1, %s11
  $region7: #{conv_bn_relu_forward.2} parent=0 // loop_footer_branch
    %10 = sbr.rel target = $region3
  $region8: #{conv_bn_relu_forward.2} parent=0 // loop_exit
    _

</llo_original>
